<compile_context>
chip_gen: v7x
topology: tpu7x:2x2x1
jax: 0.10.0
libtpu: 0.0.40
codegen_flags: <defaults>
</compile_context>

<pallas_src>
import jax
import jax.numpy as jnp
from jax.experimental import pallas as pl
from jax.experimental.pallas import tpu as pltpu

IN_FEATURES = 32 * 32 * 3   # 3072
OUT_FEATURES = 10

SUBLANE = 8
LANE = 128
MAX_TILE_B = 512            # 512x3072 f32 X tile = 6 MiB per buffer


def _round_up(x, m):
    return (x + m - 1) // m * m


def lazynet2_kernel(x_ref, w_ref, b_ref, o_ref):
    # bf16 MXU operands (single pass), f32 accumulation.
    x_bf = x_ref[...].astype(jnp.bfloat16)
    z = jnp.dot(x_bf, w_ref[...], preferred_element_type=jnp.float32)
    z = z + b_ref[...]                                  # bias in f32
    # Numerically stable logsigmoid(z) = min(z, 0) - log1p(exp(-|z|)).
    # exp/log go to the EUP slot, which is otherwise idle here (free filler).
    o_ref[...] = jnp.minimum(z, 0.0) - jnp.log1p(jnp.exp(-jnp.abs(z)))


def prepare_params(weight, bias):
    """One-time parameter prep (hoisted out of the per-call path).

    weight: (10, 3072) f32 (PyTorch layout); bias: (10,) f32.
    Returns W transposed to (3072, 128) bf16 (lane-padded) and bias (1, 128) f32.
    """
    w_p = (jnp.zeros((IN_FEATURES, LANE), jnp.bfloat16)
           .at[:, :OUT_FEATURES].set(weight.T.astype(jnp.bfloat16)))
    bias_p = (jnp.zeros((1, LANE), jnp.float32)
              .at[0, :OUT_FEATURES].set(bias.astype(jnp.float32)))
    return w_p, bias_p


def _pick_tile_b(n):
    # Aim for >= 2 grid steps whenever possible: enables DMA/compute overlap
    # and lets v7x shard the "parallel" batch axis across both TensorCores.
    if n <= SUBLANE:
        return SUBLANE
    return min(MAX_TILE_B, _round_up(pl.cdiv(n, 2), SUBLANE))


@jax.jit
def lazynet2_forward(x_nchw, w_p, bias_p):
    """x_nchw: (N, 3, 32, 32) f32; w_p: (3072, 128) bf16; bias_p: (1, 128) f32."""
    n = x_nchw.shape[0]
    # Flatten exactly like torch's .view(-1, 3072) (row-major over C, H, W).
    # No dtype cast here: the f32 X stream goes straight to the kernel.
    x2d = x_nchw.reshape(n, IN_FEATURES)

    tile_b = _pick_tile_b(n)
    grid_b = pl.cdiv(n, tile_b)

    cost = pl.CostEstimate(
        flops=2 * n * IN_FEATURES * LANE,
        transcendentals=2 * n * LANE,
        bytes_accessed=(n * IN_FEATURES * 4        # X stream (dominant)
                        + IN_FEATURES * LANE * 2   # W (bf16, VMEM-resident)
                        + n * LANE * 4),           # output
    )

    out_p = pl.pallas_call(
        lazynet2_kernel,
        out_shape=jax.ShapeDtypeStruct((n, LANE), jnp.float32),
        grid_spec=pltpu.PrefetchScalarGridSpec(
            num_scalar_prefetch=0,
            grid=(grid_b,),
            in_specs=[
                # X: streamed, double-buffered along the batch grid axis.
                pl.BlockSpec((tile_b, IN_FEATURES), lambda i: (i, 0)),
                # W, bias: constant index_map -> stay resident in VMEM.
                pl.BlockSpec((IN_FEATURES, LANE), lambda i: (0, 0)),
                pl.BlockSpec((1, LANE), lambda i: (0, 0)),
            ],
            out_specs=pl.BlockSpec((tile_b, LANE), lambda i: (i, 0)),
        ),
        compiler_params=pltpu.CompilerParams(
            # Batch axis is embarrassingly parallel (no accumulator): lets v7x
            # shard grid steps across its 2 TensorCores; neutral on v5e/v6e.
            dimension_semantics=("parallel",),
            # ~14 MiB actually used; set explicitly so v5e's 16 MiB default
            # scoped limit is not the binding constraint.
            vmem_limit_bytes=32 * 1024 * 1024,
        ),
        cost_estimate=cost,
    )(x2d, w_p, bias_p)

    # Drop the lane padding.  Ragged-last-block rows never reach the output
    # (masked stores), so no batch slice is needed.
    return out_p[:, :OUT_FEATURES]


def init_params(key):
    """Deterministic fc1 params, matching nn.Linear default init bounds."""
    kw, kb = jax.random.split(key)
    bound = 1.0 / jnp.sqrt(jnp.float32(IN_FEATURES))
    weight = jax.random.uniform(kw, (OUT_FEATURES, IN_FEATURES), jnp.float32,
                                minval=-bound, maxval=bound)
    bias = jax.random.uniform(kb, (OUT_FEATURES,), jnp.float32,
                              minval=-bound, maxval=bound)
    return weight, bias


if __name__ == "__main__":
    key = jax.random.PRNGKey(0)
    k_x, k_p = jax.random.split(key)

    # Input consistent with the module: CIFAR-shaped NCHW batch.
    x = jax.random.normal(k_x, (2, 3, 32, 32), jnp.float32)
    weight, bias = init_params(k_p)
    w_p, bias_p = prepare_params(weight, bias)   # one-time prep, not per call

    out = lazynet2_forward(x, w_p, bias_p)
    out = jax.block_until_ready(out)

    # Reference check in plain f32 JAX.  Tolerance is loosened because the
    # kernel uses bf16 MXU operands (with f32 accumulation).
    z_ref = x.reshape(2, IN_FEATURES) @ weight.T + bias
    ref = jnp.minimum(z_ref, 0.0) - jnp.log1p(jnp.exp(-jnp.abs(z_ref)))
    assert out.shape == (2, OUT_FEATURES)
    assert jnp.allclose(out, ref, atol=2e-2, rtol=2e-2)

    print("KERNEL_OK")
</pallas_src>

<mosaic_0001>
module attributes {stable_mosaic.version = 11 : i64} {
  func.func @lazynet2_kernel(%arg0: i32, %arg1: memref<8x3072xf32, #tpu.memory_space<vmem>>, %arg2: memref<3072x128xbf16, #tpu.memory_space<vmem>>, %arg3: memref<1x128xf32, #tpu.memory_space<vmem>>, %arg4: memref<8x128xf32, #tpu.memory_space<vmem>>) attributes {dimension_semantics = [#tpu.dimension_semantics<parallel>], iteration_bounds = array<i64: 1>, scalar_prefetch = 0 : i64, scratch_operands = 0 : i64, tpu.core_type = #tpu.core_type<tc>, window_params = [{transform_indices = @transform_0, window_bounds = array<i64: 8, 3072>}, {pipeline_mode = #tpu.pipeline_mode<synchronous>, transform_indices = @transform_1, window_bounds = array<i64: 3072, 128>}, {pipeline_mode = #tpu.pipeline_mode<synchronous>, transform_indices = @transform_2, window_bounds = array<i64: 1, 128>}, {transform_indices = @transform_3, window_bounds = array<i64: 8, 128>}]} {
    %c0 = arith.constant 0 : index
    %c0_0 = arith.constant 0 : index
    %0 = vector.load %arg1[%c0, %c0_0] : memref<8x3072xf32, #tpu.memory_space<vmem>>, vector<8x3072xf32>
    %1 = arith.truncf %0 : vector<8x3072xf32> to vector<8x3072xbf16>
    %c0_1 = arith.constant 0 : index
    %c0_2 = arith.constant 0 : index
    %2 = vector.load %arg2[%c0_1, %c0_2] : memref<3072x128xbf16, #tpu.memory_space<vmem>>, vector<3072x128xbf16>
    %cst = arith.constant dense<0.000000e+00> : vector<8x128xf32>
    %3 = tpu.matmul %1, %2, %cst {dimension_numbers = #tpu.dot_dimension_numbers<[1], [0], [0], [1], [0, 0, 1, 1], [], []>} : vector<8x3072xbf16>, vector<3072x128xbf16>, vector<8x128xf32> -> vector<8x128xf32>
    %c0_3 = arith.constant 0 : index
    %c0_4 = arith.constant 0 : index
    %4 = vector.load %arg3[%c0_3, %c0_4] : memref<1x128xf32, #tpu.memory_space<vmem>>, vector<1x128xf32>
    %5 = vector.broadcast %4 : vector<1x128xf32> to vector<8x128xf32>
    %6 = arith.addf %3, %5 : vector<8x128xf32>
    %cst_5 = arith.constant 0.000000e+00 : f32
    %7 = vector.broadcast %cst_5 : f32 to vector<8x128xf32>
    %8 = arith.minimumf %6, %7 : vector<8x128xf32>
    %9 = math.absf %6 : vector<8x128xf32>
    %cst_6 = arith.constant 0.000000e+00 : f32
    %10 = vector.broadcast %cst_6 : f32 to vector<8x128xf32>
    %11 = arith.subf %10, %9 : vector<8x128xf32>
    %12 = math.exp %11 : vector<8x128xf32>
    %13 = math.log1p %12 : vector<8x128xf32>
    %14 = arith.subf %8, %13 : vector<8x128xf32>
    %c0_7 = arith.constant 0 : index
    %c0_8 = arith.constant 0 : index
    %15 = vector.load %arg4[%c0_7, %c0_8] : memref<8x128xf32, #tpu.memory_space<vmem>>, vector<8x128xf32>
    tpu.vector_store %arg4[%c0_7, %c0_8], %14 {strides = array<i32>} : memref<8x128xf32, #tpu.memory_space<vmem>>, vector<8x128xf32>,
    return
  }
  func.func @transform_0(%arg0: i32) -> (i32, i32) {
    %c0_i32 = arith.constant 0 : i32
    %c0_i32_0 = arith.constant 0 : i32
    return %arg0, %c0_i32 : i32, i32
  }
  func.func @transform_1(%arg0: i32) -> (i32, i32) {
    %c0_i32 = arith.constant 0 : i32
    %c0_i32_0 = arith.constant 0 : i32
    %c0_i32_1 = arith.constant 0 : i32
    return %c0_i32, %c0_i32_0 : i32, i32
  }
  func.func @transform_2(%arg0: i32) -> (i32, i32) {
    %c0_i32 = arith.constant 0 : i32
    %c0_i32_0 = arith.constant 0 : i32
    %c0_i32_1 = arith.constant 0 : i32
    return %c0_i32, %c0_i32_0 : i32, i32
  }
  func.func @transform_3(%arg0: i32) -> (i32, i32) {
    %c0_i32 = arith.constant 0 : i32
    %c0_i32_0 = arith.constant 0 : i32
    return %arg0, %c0_i32 : i32, i32
  }
}

</mosaic_0001>

<llo_original>
// kernel: lazynet2_forward.1
$region0: #{lazynet2_forward.1}
  #allocation0 [shape = 'u32[]', space=smem, size = 0x4, offset = 0x4, fixed_abs, tag = 'smem constant byte address 0x4 - core index']
  #allocation1 [shape = 'u32[144,128]{1,0:T(1,128)}', space=vmem, size = 0x12000, scoped, tag = 'internal scratch']
  %s0 = inlined_call_operand.vmem [shape: f32[2,3072], index: 0, kind: input, shape index: {}]
  %s1 = inlined_call_operand.hbm [shape: bf16[3072,128], index: 1, kind: input, shape index: {}]
  %s2 = inlined_call_operand.vmem [shape: f32[1,128], index: 2, kind: input, shape index: {}]
  %s3 = inlined_call_operand.hbm [shape: f32[2,128], index: 3, kind: output, shape index: {}]
  %s4 = sld [smem:[#allocation0]]
  $region26: #{lazynet2_forward.1} parent=0
    _
  %s6 = ssub.s32 1, %s4
  %s7 = scalar_select 0, %s6, %s4
  $region1: #{lazynet2_forward.1} parent=0
    #allocation2 [shape = 'u8[786432]{0}', space=vmem, size = 0xc0000, scoped, tag = 'input window, operand 1, single buffered']
    #allocation3 [shape = 's32[1]{0}', space=sflag, size = 0x4, scoped, tag = 'scoped memory for lazynet2_forward.1']
    #allocation4 [shape = 's32[1]{0}', space=sflag, size = 0x4, scoped, tag = 'scoped memory for lazynet2_forward.1']
    #allocation5 [shape = 'u8[4096]{0}', space=vmem, size = 0x1000, scoped, tag = 'output window, operand 0, single buffered']
    %8 = vsyncpa [#allocation3], 0
    %9 = vsyncpa [#allocation4], 0
    // Predicated region
    $region2: #{lazynet2_forward.1} parent=1 // pred_check
      _
    $region3: #{lazynet2_forward.1} parent=1 // pred_check_branch
      %11 = sbr.rel (0) target = $region5
    $region4: #{lazynet2_forward.1} parent=1 // pred_region
      _
    $region5: #{lazynet2_forward.1} parent=1 // pred_fallthru
      _
    // Predicated region
    $region6: #{lazynet2_forward.1} parent=1 // pred_check
      _
    $region7: #{lazynet2_forward.1} parent=1 // pred_check_branch
      %13 = sbr.rel (0) target = $region9
    $region8: #{lazynet2_forward.1} parent=1 // pred_region
      %s15 = ssub.s32 24576, 24576
      %16 = vsyncadd [#allocation3], %s15
      %s17 = sshll.u32 [#allocation2], 4
      %s18 = int_to_ptr.vmem [resolvable:$true] %s17
      %23 = dma.hbm_to_vmem [thread:$0]  %s1, 24576, %s18, [#allocation3], 64, 64, 4
    $region9: #{lazynet2_forward.1} parent=1 // pred_fallthru
      _
    // Predicated region
    $region10: #{lazynet2_forward.1} parent=1 // pred_check
      _
    $region11: #{lazynet2_forward.1} parent=1 // pred_check_branch
      %25 = sbr.rel (0) target = $region13
    $region12: #{lazynet2_forward.1} parent=1 // pred_region
      _
    $region13: #{lazynet2_forward.1} parent=1 // pred_fallthru
      _
    // Predicated region
    $region14: #{lazynet2_forward.1} parent=1 // pred_check
      _
    $region15: #{lazynet2_forward.1} parent=1 // pred_check_branch
      %27 = sbr.rel (0) target = $region17
    $region16: #{lazynet2_forward.1} parent=1 // pred_region
      %28 = dma.done [#allocation3], 24576
    $region17: #{lazynet2_forward.1} parent=1 // pred_fallthru
      _
    %v30 = vld [vmem:[%s0] sm:$0xff]
    %v31 = vld [vmem:[%s0 + $0x8] sm:$0xff]
    %v32 = vld [vmem:[%s0 + $0x10] sm:$0xff]
    %v33 = vld [vmem:[%s0 + $0x18] sm:$0xff]
    %v34 = vld [vmem:[%s0 + $0x20] sm:$0xff]
    %v35 = vld [vmem:[%s0 + $0x28] sm:$0xff]
    %v36 = vld [vmem:[%s0 + $0x30] sm:$0xff]
    %v37 = vld [vmem:[%s0 + $0x38] sm:$0xff]
    %v38 = vld [vmem:[%s0 + $0x40] sm:$0xff]
    %v39 = vld [vmem:[%s0 + $0x48] sm:$0xff]
    %v40 = vld [vmem:[%s0 + $0x50] sm:$0xff]
    %v41 = vld [vmem:[%s0 + $0x58] sm:$0xff]
    %v42 = vld [vmem:[%s0 + $0x60] sm:$0xff]
    %v43 = vld [vmem:[%s0 + $0x68] sm:$0xff]
    %v44 = vld [vmem:[%s0 + $0x70] sm:$0xff]
    %v45 = vld [vmem:[%s0 + $0x78] sm:$0xff]
    %v46 = vld [vmem:[%s0 + $0x80] sm:$0xff]
    %v47 = vld [vmem:[%s0 + $0x88] sm:$0xff]
    %v48 = vld [vmem:[%s0 + $0x90] sm:$0xff]
    %v49 = vld [vmem:[%s0 + $0x98] sm:$0xff]
    %v50 = vld [vmem:[%s0 + $0xa0] sm:$0xff]
    %v51 = vld [vmem:[%s0 + $0xa8] sm:$0xff]
    %v52 = vld [vmem:[%s0 + $0xb0] sm:$0xff]
    %v53 = vld [vmem:[%s0 + $0xb8] sm:$0xff]
    %v78 = vcombine.low %v30, %v36
    %v79 = vcombine.high %v30, %v36
    %v80 = vcombine.low %v42, %v48
    %v81 = vcombine.high %v42, %v48
    %v83 = vunpack.c.l.s4 1983009808
    %v84 = vunpack.c.0.s8 %v83
    %v85 = vlaneseq
    %v86 = vshrl.u32 %v85, 7
    %v87 = vsub.s32 %v84, %v86
    %v88 = vrot.slane %v78, %v87
    %v90 = vunpack.c.l.s4 1983009808
    %v91 = vunpack.c.0.s8 %v90
    %v92 = vlaneseq
    %v93 = vshrl.u32 %v92, 7
    %v94 = vsub.s32 %v91, %v93
    %v95 = vrot.slane %v79, %v94
    %v97 = vunpack.c.l.s4 1983009808
    %v98 = vunpack.c.0.s8 %v97
    %v99 = vlaneseq
    %v100 = vshrl.u32 %v99, 7
    %v101 = vsub.s32 %v98, %v100
    %v102 = vrot.slane %v80, %v101
    %v104 = vunpack.c.l.s4 1983009808
    %v105 = vunpack.c.0.s8 %v104
    %v106 = vlaneseq
    %v107 = vshrl.u32 %v106, 7
    %v108 = vsub.s32 %v105, %v107
    %v109 = vrot.slane %v81, %v108
    %v110 = vcombine.low %v88, %v102
    %v111 = vcombine.high %v88, %v102
    %v112 = vcombine.low %v95, %v109
    %v113 = vcombine.high %v95, %v109
    %v114 = vcombine.low %v31, %v37
    %v115 = vcombine.high %v31, %v37
    %v116 = vcombine.low %v43, %v49
    %v117 = vcombine.high %v43, %v49
    %v119 = vunpack.c.l.s4 1983009808
    %v120 = vunpack.c.0.s8 %v119
    %v121 = vlaneseq
    %v122 = vshrl.u32 %v121, 7
    %v123 = vsub.s32 %v120, %v122
    %v124 = vrot.slane %v114, %v123
    %v126 = vunpack.c.l.s4 1983009808
    %v127 = vunpack.c.0.s8 %v126
    %v128 = vlaneseq
    %v129 = vshrl.u32 %v128, 7
    %v130 = vsub.s32 %v127, %v129
    %v131 = vrot.slane %v115, %v130
    %v133 = vunpack.c.l.s4 1983009808
    %v134 = vunpack.c.0.s8 %v133
    %v135 = vlaneseq
    %v136 = vshrl.u32 %v135, 7
    %v137 = vsub.s32 %v134, %v136
    %v138 = vrot.slane %v116, %v137
    %v140 = vunpack.c.l.s4 1983009808
    %v141 = vunpack.c.0.s8 %v140
    %v142 = vlaneseq
    %v143 = vshrl.u32 %v142, 7
    %v144 = vsub.s32 %v141, %v143
    %v145 = vrot.slane %v117, %v144
    %v146 = vcombine.low %v124, %v138
    %v147 = vcombine.high %v124, %v138
    %v148 = vcombine.low %v131, %v145
    %v149 = vcombine.high %v131, %v145
    %v150 = vcombine.low %v32, %v38
    %v151 = vcombine.high %v32, %v38
    %v152 = vcombine.low %v44, %v50
    %v153 = vcombine.high %v44, %v50
    %v155 = vunpack.c.l.s4 1983009808
    %v156 = vunpack.c.0.s8 %v155
    %v157 = vlaneseq
    %v158 = vshrl.u32 %v157, 7
    %v159 = vsub.s32 %v156, %v158
    %v160 = vrot.slane %v150, %v159
    %v162 = vunpack.c.l.s4 1983009808
    %v163 = vunpack.c.0.s8 %v162
    %v164 = vlaneseq
    %v165 = vshrl.u32 %v164, 7
    %v166 = vsub.s32 %v163, %v165
    %v167 = vrot.slane %v151, %v166
    %v169 = vunpack.c.l.s4 1983009808
    %v170 = vunpack.c.0.s8 %v169
    %v171 = vlaneseq
    %v172 = vshrl.u32 %v171, 7
    %v173 = vsub.s32 %v170, %v172
    %v174 = vrot.slane %v152, %v173
    %v176 = vunpack.c.l.s4 1983009808
    %v177 = vunpack.c.0.s8 %v176
    %v178 = vlaneseq
    %v179 = vshrl.u32 %v178, 7
    %v180 = vsub.s32 %v177, %v179
    %v181 = vrot.slane %v153, %v180
    %v182 = vcombine.low %v160, %v174
    %v183 = vcombine.high %v160, %v174
    %v184 = vcombine.low %v167, %v181
    %v185 = vcombine.high %v167, %v181
    %v186 = vcombine.low %v33, %v39
    %v187 = vcombine.high %v33, %v39
    %v188 = vcombine.low %v45, %v51
    %v189 = vcombine.high %v45, %v51
    %v191 = vunpack.c.l.s4 1983009808
    %v192 = vunpack.c.0.s8 %v191
    %v193 = vlaneseq
    %v194 = vshrl.u32 %v193, 7
    %v195 = vsub.s32 %v192, %v194
    %v196 = vrot.slane %v186, %v195
    %v198 = vunpack.c.l.s4 1983009808
    %v199 = vunpack.c.0.s8 %v198
    %v200 = vlaneseq
    %v201 = vshrl.u32 %v200, 7
    %v202 = vsub.s32 %v199, %v201
    %v203 = vrot.slane %v187, %v202
    %v205 = vunpack.c.l.s4 1983009808
    %v206 = vunpack.c.0.s8 %v205
    %v207 = vlaneseq
    %v208 = vshrl.u32 %v207, 7
    %v209 = vsub.s32 %v206, %v208
    %v210 = vrot.slane %v188, %v209
    %v212 = vunpack.c.l.s4 1983009808
    %v213 = vunpack.c.0.s8 %v212
    %v214 = vlaneseq
    %v215 = vshrl.u32 %v214, 7
    %v216 = vsub.s32 %v213, %v215
    %v217 = vrot.slane %v189, %v216
    %v218 = vcombine.low %v196, %v210
    %v219 = vcombine.high %v196, %v210
    %v220 = vcombine.low %v203, %v217
    %v221 = vcombine.high %v203, %v217
    %v222 = vcombine.low %v34, %v40
    %v223 = vcombine.high %v34, %v40
    %v224 = vcombine.low %v46, %v52
    %v225 = vcombine.high %v46, %v52
    %v227 = vunpack.c.l.s4 1983009808
    %v228 = vunpack.c.0.s8 %v227
    %v229 = vlaneseq
    %v230 = vshrl.u32 %v229, 7
    %v231 = vsub.s32 %v228, %v230
    %v232 = vrot.slane %v222, %v231
    %v234 = vunpack.c.l.s4 1983009808
    %v235 = vunpack.c.0.s8 %v234
    %v236 = vlaneseq
    %v237 = vshrl.u32 %v236, 7
    %v238 = vsub.s32 %v235, %v237
    %v239 = vrot.slane %v223, %v238
    %v241 = vunpack.c.l.s4 1983009808
    %v242 = vunpack.c.0.s8 %v241
    %v243 = vlaneseq
    %v244 = vshrl.u32 %v243, 7
    %v245 = vsub.s32 %v242, %v244
    %v246 = vrot.slane %v224, %v245
    %v248 = vunpack.c.l.s4 1983009808
    %v249 = vunpack.c.0.s8 %v248
    %v250 = vlaneseq
    %v251 = vshrl.u32 %v250, 7
    %v252 = vsub.s32 %v249, %v251
    %v253 = vrot.slane %v225, %v252
    %v254 = vcombine.low %v232, %v246
    %v255 = vcombine.high %v232, %v246
    %v256 = vcombine.low %v239, %v253
    %v257 = vcombine.high %v239, %v253
    %v258 = vcombine.low %v35, %v41
    %v259 = vcombine.high %v35, %v41
    %v260 = vcombine.low %v47, %v53
    %v261 = vcombine.high %v47, %v53
    %v263 = vunpack.c.l.s4 1983009808
    %v264 = vunpack.c.0.s8 %v263
    %v265 = vlaneseq
    %v266 = vshrl.u32 %v265, 7
    %v267 = vsub.s32 %v264, %v266
    %v268 = vrot.slane %v258, %v267
    %v270 = vunpack.c.l.s4 1983009808
    %v271 = vunpack.c.0.s8 %v270
    %v272 = vlaneseq
    %v273 = vshrl.u32 %v272, 7
    %v274 = vsub.s32 %v271, %v273
    %v275 = vrot.slane %v259, %v274
    %v277 = vunpack.c.l.s4 1983009808
    %v278 = vunpack.c.0.s8 %v277
    %v279 = vlaneseq
    %v280 = vshrl.u32 %v279, 7
    %v281 = vsub.s32 %v278, %v280
    %v282 = vrot.slane %v260, %v281
    %v284 = vunpack.c.l.s4 1983009808
    %v285 = vunpack.c.0.s8 %v284
    %v286 = vlaneseq
    %v287 = vshrl.u32 %v286, 7
    %v288 = vsub.s32 %v285, %v287
    %v289 = vrot.slane %v261, %v288
    %v290 = vcombine.low %v268, %v282
    %v291 = vcombine.high %v268, %v282
    %v292 = vcombine.low %v275, %v289
    %v293 = vcombine.high %v275, %v289
    %v318 = vpack.c.bf16 %v110, %v110
    %v319 = vpack.c.bf16 %v111, %v111
    %v320 = vpack.c.bf16 %v112, %v112
    %v321 = vpack.c.bf16 %v113, %v113
    %v322 = vpack.c.bf16 %v146, %v146
    %v323 = vpack.c.bf16 %v147, %v147
    %v324 = vpack.c.bf16 %v148, %v148
    %v325 = vpack.c.bf16 %v149, %v149
    %v326 = vpack.c.bf16 %v182, %v182
    %v327 = vpack.c.bf16 %v183, %v183
    %v328 = vpack.c.bf16 %v184, %v184
    %v329 = vpack.c.bf16 %v185, %v185
    %v330 = vpack.c.bf16 %v218, %v218
    %v331 = vpack.c.bf16 %v219, %v219
    %v332 = vpack.c.bf16 %v220, %v220
    %v333 = vpack.c.bf16 %v221, %v221
    %v334 = vpack.c.bf16 %v254, %v254
    %v335 = vpack.c.bf16 %v255, %v255
    %v336 = vpack.c.bf16 %v256, %v256
    %v337 = vpack.c.bf16 %v257, %v257
    %v338 = vpack.c.bf16 %v290, %v290
    %v339 = vpack.c.bf16 %v291, %v291
    %v340 = vpack.c.bf16 %v292, %v292
    %v341 = vpack.c.bf16 %v293, %v293
    %v342 = vld [vmem:[#allocation2] sm:$0xf]
    %v343 = vld [vmem:[#allocation2 + $0x4] sm:$0xf]
    %v344 = vld [vmem:[#allocation2 + $0x8] sm:$0xf]
    %v345 = vld [vmem:[#allocation2 + $0xc] sm:$0xf]
    %v346 = vld [vmem:[#allocation2 + $0x10] sm:$0xf]
    %v347 = vld [vmem:[#allocation2 + $0x14] sm:$0xf]
    %v348 = vld [vmem:[#allocation2 + $0x18] sm:$0xf]
    %v349 = vld [vmem:[#allocation2 + $0x1c] sm:$0xf]
    %v350 = vld [vmem:[#allocation2 + $0x20] sm:$0xf]
    %v351 = vld [vmem:[#allocation2 + $0x24] sm:$0xf]
    %v352 = vld [vmem:[#allocation2 + $0x28] sm:$0xf]
    %v353 = vld [vmem:[#allocation2 + $0x2c] sm:$0xf]
    %v354 = vld [vmem:[#allocation2 + $0x30] sm:$0xf]
    %v355 = vld [vmem:[#allocation2 + $0x34] sm:$0xf]
    %v356 = vld [vmem:[#allocation2 + $0x38] sm:$0xf]
    %v357 = vld [vmem:[#allocation2 + $0x3c] sm:$0xf]
    %v358 = vld [vmem:[#allocation2 + $0x40] sm:$0xf]
    %v359 = vld [vmem:[#allocation2 + $0x44] sm:$0xf]
    %v360 = vld [vmem:[#allocation2 + $0x48] sm:$0xf]
    %v361 = vld [vmem:[#allocation2 + $0x4c] sm:$0xf]
    %v362 = vld [vmem:[#allocation2 + $0x50] sm:$0xf]
    %v363 = vld [vmem:[#allocation2 + $0x54] sm:$0xf]
    %v364 = vld [vmem:[#allocation2 + $0x58] sm:$0xf]
    %v365 = vld [vmem:[#allocation2 + $0x5c] sm:$0xf]
    %v366 = vld [vmem:[#allocation2 + $0x60] sm:$0xf]
    %v367 = vld [vmem:[#allocation2 + $0x64] sm:$0xf]
    %v368 = vld [vmem:[#allocation2 + $0x68] sm:$0xf]
    %v369 = vld [vmem:[#allocation2 + $0x6c] sm:$0xf]
    %v370 = vld [vmem:[#allocation2 + $0x70] sm:$0xf]
    %v371 = vld [vmem:[#allocation2 + $0x74] sm:$0xf]
    %v372 = vld [vmem:[#allocation2 + $0x78] sm:$0xf]
    %v373 = vld [vmem:[#allocation2 + $0x7c] sm:$0xf]
    %v374 = vld [vmem:[#allocation2 + $0x80] sm:$0xf]
    %v375 = vld [vmem:[#allocation2 + $0x84] sm:$0xf]
    %v376 = vld [vmem:[#allocation2 + $0x88] sm:$0xf]
    %v377 = vld [vmem:[#allocation2 + $0x8c] sm:$0xf]
    %v378 = vld [vmem:[#allocation2 + $0x90] sm:$0xf]
    %v379 = vld [vmem:[#allocation2 + $0x94] sm:$0xf]
    %v380 = vld [vmem:[#allocation2 + $0x98] sm:$0xf]
    %v381 = vld [vmem:[#allocation2 + $0x9c] sm:$0xf]
    %v382 = vld [vmem:[#allocation2 + $0xa0] sm:$0xf]
    %v383 = vld [vmem:[#allocation2 + $0xa4] sm:$0xf]
    %v384 = vld [vmem:[#allocation2 + $0xa8] sm:$0xf]
    %v385 = vld [vmem:[#allocation2 + $0xac] sm:$0xf]
    %v386 = vld [vmem:[#allocation2 + $0xb0] sm:$0xf]
    %v387 = vld [vmem:[#allocation2 + $0xb4] sm:$0xf]
    %v388 = vld [vmem:[#allocation2 + $0xb8] sm:$0xf]
    %v389 = vld [vmem:[#allocation2 + $0xbc] sm:$0xf]
    %v390 = vld [vmem:[#allocation2 + $0xc0] sm:$0xf]
    %v391 = vld [vmem:[#allocation2 + $0xc4] sm:$0xf]
    %v392 = vld [vmem:[#allocation2 + $0xc8] sm:$0xf]
    %v393 = vld [vmem:[#allocation2 + $0xcc] sm:$0xf]
    %v394 = vld [vmem:[#allocation2 + $0xd0] sm:$0xf]
    %v395 = vld [vmem:[#allocation2 + $0xd4] sm:$0xf]
    %v396 = vld [vmem:[#allocation2 + $0xd8] sm:$0xf]
    %v397 = vld [vmem:[#allocation2 + $0xdc] sm:$0xf]
    %v398 = vld [vmem:[#allocation2 + $0xe0] sm:$0xf]
    %v399 = vld [vmem:[#allocation2 + $0xe4] sm:$0xf]
    %v400 = vld [vmem:[#allocation2 + $0xe8] sm:$0xf]
    %v401 = vld [vmem:[#allocation2 + $0xec] sm:$0xf]
    %v402 = vld [vmem:[#allocation2 + $0xf0] sm:$0xf]
    %v403 = vld [vmem:[#allocation2 + $0xf4] sm:$0xf]
    %v404 = vld [vmem:[#allocation2 + $0xf8] sm:$0xf]
    %v405 = vld [vmem:[#allocation2 + $0xfc] sm:$0xf]
    %v406 = vld [vmem:[#allocation2 + $0x100] sm:$0xf]
    %v407 = vld [vmem:[#allocation2 + $0x104] sm:$0xf]
    %v408 = vld [vmem:[#allocation2 + $0x108] sm:$0xf]
    %v409 = vld [vmem:[#allocation2 + $0x10c] sm:$0xf]
    %v410 = vld [vmem:[#allocation2 + $0x110] sm:$0xf]
    %v411 = vld [vmem:[#allocation2 + $0x114] sm:$0xf]
    %v412 = vld [vmem:[#allocation2 + $0x118] sm:$0xf]
    %v413 = vld [vmem:[#allocation2 + $0x11c] sm:$0xf]
    %v414 = vld [vmem:[#allocation2 + $0x120] sm:$0xf]
    %v415 = vld [vmem:[#allocation2 + $0x124] sm:$0xf]
    %v416 = vld [vmem:[#allocation2 + $0x128] sm:$0xf]
    %v417 = vld [vmem:[#allocation2 + $0x12c] sm:$0xf]
    %v418 = vld [vmem:[#allocation2 + $0x130] sm:$0xf]
    %v419 = vld [vmem:[#allocation2 + $0x134] sm:$0xf]
    %v420 = vld [vmem:[#allocation2 + $0x138] sm:$0xf]
    %v421 = vld [vmem:[#allocation2 + $0x13c] sm:$0xf]
    %v422 = vld [vmem:[#allocation2 + $0x140] sm:$0xf]
    %v423 = vld [vmem:[#allocation2 + $0x144] sm:$0xf]
    %v424 = vld [vmem:[#allocation2 + $0x148] sm:$0xf]
    %v425 = vld [vmem:[#allocation2 + $0x14c] sm:$0xf]
    %v426 = vld [vmem:[#allocation2 + $0x150] sm:$0xf]
    %v427 = vld [vmem:[#allocation2 + $0x154] sm:$0xf]
    %v428 = vld [vmem:[#allocation2 + $0x158] sm:$0xf]
    %v429 = vld [vmem:[#allocation2 + $0x15c] sm:$0xf]
    %v430 = vld [vmem:[#allocation2 + $0x160] sm:$0xf]
    %v431 = vld [vmem:[#allocation2 + $0x164] sm:$0xf]
    %v432 = vld [vmem:[#allocation2 + $0x168] sm:$0xf]
    %v433 = vld [vmem:[#allocation2 + $0x16c] sm:$0xf]
    %v434 = vld [vmem:[#allocation2 + $0x170] sm:$0xf]
    %v435 = vld [vmem:[#allocation2 + $0x174] sm:$0xf]
    %v436 = vld [vmem:[#allocation2 + $0x178] sm:$0xf]
    %v437 = vld [vmem:[#allocation2 + $0x17c] sm:$0xf]
    %v438 = vld [vmem:[#allocation2 + $0x180] sm:$0xf]
    %v439 = vld [vmem:[#allocation2 + $0x184] sm:$0xf]
    %v440 = vld [vmem:[#allocation2 + $0x188] sm:$0xf]
    %v441 = vld [vmem:[#allocation2 + $0x18c] sm:$0xf]
    %v442 = vld [vmem:[#allocation2 + $0x190] sm:$0xf]
    %v443 = vld [vmem:[#allocation2 + $0x194] sm:$0xf]
    %v444 = vld [vmem:[#allocation2 + $0x198] sm:$0xf]
    %v445 = vld [vmem:[#allocation2 + $0x19c] sm:$0xf]
    %v446 = vld [vmem:[#allocation2 + $0x1a0] sm:$0xf]
    %v447 = vld [vmem:[#allocation2 + $0x1a4] sm:$0xf]
    %v448 = vld [vmem:[#allocation2 + $0x1a8] sm:$0xf]
    %v449 = vld [vmem:[#allocation2 + $0x1ac] sm:$0xf]
    %v450 = vld [vmem:[#allocation2 + $0x1b0] sm:$0xf]
    %v451 = vld [vmem:[#allocation2 + $0x1b4] sm:$0xf]
    %v452 = vld [vmem:[#allocation2 + $0x1b8] sm:$0xf]
    %v453 = vld [vmem:[#allocation2 + $0x1bc] sm:$0xf]
    %v454 = vld [vmem:[#allocation2 + $0x1c0] sm:$0xf]
    %v455 = vld [vmem:[#allocation2 + $0x1c4] sm:$0xf]
    %v456 = vld [vmem:[#allocation2 + $0x1c8] sm:$0xf]
    %v457 = vld [vmem:[#allocation2 + $0x1cc] sm:$0xf]
    %v458 = vld [vmem:[#allocation2 + $0x1d0] sm:$0xf]
    %v459 = vld [vmem:[#allocation2 + $0x1d4] sm:$0xf]
    %v460 = vld [vmem:[#allocation2 + $0x1d8] sm:$0xf]
    %v461 = vld [vmem:[#allocation2 + $0x1dc] sm:$0xf]
    %v462 = vld [vmem:[#allocation2 + $0x1e0] sm:$0xf]
    %v463 = vld [vmem:[#allocation2 + $0x1e4] sm:$0xf]
    %v464 = vld [vmem:[#allocation2 + $0x1e8] sm:$0xf]
    %v465 = vld [vmem:[#allocation2 + $0x1ec] sm:$0xf]
    %v466 = vld [vmem:[#allocation2 + $0x1f0] sm:$0xf]
    %v467 = vld [vmem:[#allocation2 + $0x1f4] sm:$0xf]
    %v468 = vld [vmem:[#allocation2 + $0x1f8] sm:$0xf]
    %v469 = vld [vmem:[#allocation2 + $0x1fc] sm:$0xf]
    %v470 = vld [vmem:[#allocation2 + $0x200] sm:$0xf]
    %v471 = vld [vmem:[#allocation2 + $0x204] sm:$0xf]
    %v472 = vld [vmem:[#allocation2 + $0x208] sm:$0xf]
    %v473 = vld [vmem:[#allocation2 + $0x20c] sm:$0xf]
    %v474 = vld [vmem:[#allocation2 + $0x210] sm:$0xf]
    %v475 = vld [vmem:[#allocation2 + $0x214] sm:$0xf]
    %v476 = vld [vmem:[#allocation2 + $0x218] sm:$0xf]
    %v477 = vld [vmem:[#allocation2 + $0x21c] sm:$0xf]
    %v478 = vld [vmem:[#allocation2 + $0x220] sm:$0xf]
    %v479 = vld [vmem:[#allocation2 + $0x224] sm:$0xf]
    %v480 = vld [vmem:[#allocation2 + $0x228] sm:$0xf]
    %v481 = vld [vmem:[#allocation2 + $0x22c] sm:$0xf]
    %v482 = vld [vmem:[#allocation2 + $0x230] sm:$0xf]
    %v483 = vld [vmem:[#allocation2 + $0x234] sm:$0xf]
    %v484 = vld [vmem:[#allocation2 + $0x238] sm:$0xf]
    %v485 = vld [vmem:[#allocation2 + $0x23c] sm:$0xf]
    %v486 = vld [vmem:[#allocation2 + $0x240] sm:$0xf]
    %v487 = vld [vmem:[#allocation2 + $0x244] sm:$0xf]
    %v488 = vld [vmem:[#allocation2 + $0x248] sm:$0xf]
    %v489 = vld [vmem:[#allocation2 + $0x24c] sm:$0xf]
    %v490 = vld [vmem:[#allocation2 + $0x250] sm:$0xf]
    %v491 = vld [vmem:[#allocation2 + $0x254] sm:$0xf]
    %v492 = vld [vmem:[#allocation2 + $0x258] sm:$0xf]
    %v493 = vld [vmem:[#allocation2 + $0x25c] sm:$0xf]
    %v494 = vld [vmem:[#allocation2 + $0x260] sm:$0xf]
    %v495 = vld [vmem:[#allocation2 + $0x264] sm:$0xf]
    %v496 = vld [vmem:[#allocation2 + $0x268] sm:$0xf]
    %v497 = vld [vmem:[#allocation2 + $0x26c] sm:$0xf]
    %v498 = vld [vmem:[#allocation2 + $0x270] sm:$0xf]
    %v499 = vld [vmem:[#allocation2 + $0x274] sm:$0xf]
    %v500 = vld [vmem:[#allocation2 + $0x278] sm:$0xf]
    %v501 = vld [vmem:[#allocation2 + $0x27c] sm:$0xf]
    %v502 = vld [vmem:[#allocation2 + $0x280] sm:$0xf]
    %v503 = vld [vmem:[#allocation2 + $0x284] sm:$0xf]
    %v504 = vld [vmem:[#allocation2 + $0x288] sm:$0xf]
    %v505 = vld [vmem:[#allocation2 + $0x28c] sm:$0xf]
    %v506 = vld [vmem:[#allocation2 + $0x290] sm:$0xf]
    %v507 = vld [vmem:[#allocation2 + $0x294] sm:$0xf]
    %v508 = vld [vmem:[#allocation2 + $0x298] sm:$0xf]
    %v509 = vld [vmem:[#allocation2 + $0x29c] sm:$0xf]
    %v510 = vld [vmem:[#allocation2 + $0x2a0] sm:$0xf]
    %v511 = vld [vmem:[#allocation2 + $0x2a4] sm:$0xf]
    %v512 = vld [vmem:[#allocation2 + $0x2a8] sm:$0xf]
    %v513 = vld [vmem:[#allocation2 + $0x2ac] sm:$0xf]
    %v514 = vld [vmem:[#allocation2 + $0x2b0] sm:$0xf]
    %v515 = vld [vmem:[#allocation2 + $0x2b4] sm:$0xf]
    %v516 = vld [vmem:[#allocation2 + $0x2b8] sm:$0xf]
    %v517 = vld [vmem:[#allocation2 + $0x2bc] sm:$0xf]
    %v518 = vld [vmem:[#allocation2 + $0x2c0] sm:$0xf]
    %v519 = vld [vmem:[#allocation2 + $0x2c4] sm:$0xf]
    %v520 = vld [vmem:[#allocation2 + $0x2c8] sm:$0xf]
    %v521 = vld [vmem:[#allocation2 + $0x2cc] sm:$0xf]
    %v522 = vld [vmem:[#allocation2 + $0x2d0] sm:$0xf]
    %v523 = vld [vmem:[#allocation2 + $0x2d4] sm:$0xf]
    %v524 = vld [vmem:[#allocation2 + $0x2d8] sm:$0xf]
    %v525 = vld [vmem:[#allocation2 + $0x2dc] sm:$0xf]
    %v526 = vld [vmem:[#allocation2 + $0x2e0] sm:$0xf]
    %v527 = vld [vmem:[#allocation2 + $0x2e4] sm:$0xf]
    %v528 = vld [vmem:[#allocation2 + $0x2e8] sm:$0xf]
    %v529 = vld [vmem:[#allocation2 + $0x2ec] sm:$0xf]
    %v530 = vld [vmem:[#allocation2 + $0x2f0] sm:$0xf]
    %v531 = vld [vmem:[#allocation2 + $0x2f4] sm:$0xf]
    %v532 = vld [vmem:[#allocation2 + $0x2f8] sm:$0xf]
    %v533 = vld [vmem:[#allocation2 + $0x2fc] sm:$0xf]
    %v534 = vld [vmem:[#allocation2 + $0x300] sm:$0xf]
    %v535 = vld [vmem:[#allocation2 + $0x304] sm:$0xf]
    %v536 = vld [vmem:[#allocation2 + $0x308] sm:$0xf]
    %v537 = vld [vmem:[#allocation2 + $0x30c] sm:$0xf]
    %v538 = vld [vmem:[#allocation2 + $0x310] sm:$0xf]
    %v539 = vld [vmem:[#allocation2 + $0x314] sm:$0xf]
    %v540 = vld [vmem:[#allocation2 + $0x318] sm:$0xf]
    %v541 = vld [vmem:[#allocation2 + $0x31c] sm:$0xf]
    %v542 = vld [vmem:[#allocation2 + $0x320] sm:$0xf]
    %v543 = vld [vmem:[#allocation2 + $0x324] sm:$0xf]
    %v544 = vld [vmem:[#allocation2 + $0x328] sm:$0xf]
    %v545 = vld [vmem:[#allocation2 + $0x32c] sm:$0xf]
    %v546 = vld [vmem:[#allocation2 + $0x330] sm:$0xf]
    %v547 = vld [vmem:[#allocation2 + $0x334] sm:$0xf]
    %v548 = vld [vmem:[#allocation2 + $0x338] sm:$0xf]
    %v549 = vld [vmem:[#allocation2 + $0x33c] sm:$0xf]
    %v550 = vld [vmem:[#allocation2 + $0x340] sm:$0xf]
    %v551 = vld [vmem:[#allocation2 + $0x344] sm:$0xf]
    %v552 = vld [vmem:[#allocation2 + $0x348] sm:$0xf]
    %v553 = vld [vmem:[#allocation2 + $0x34c] sm:$0xf]
    %v554 = vld [vmem:[#allocation2 + $0x350] sm:$0xf]
    %v555 = vld [vmem:[#allocation2 + $0x354] sm:$0xf]
    %v556 = vld [vmem:[#allocation2 + $0x358] sm:$0xf]
    %v557 = vld [vmem:[#allocation2 + $0x35c] sm:$0xf]
    %v558 = vld [vmem:[#allocation2 + $0x360] sm:$0xf]
    %v559 = vld [vmem:[#allocation2 + $0x364] sm:$0xf]
    %v560 = vld [vmem:[#allocation2 + $0x368] sm:$0xf]
    %v561 = vld [vmem:[#allocation2 + $0x36c] sm:$0xf]
    %v562 = vld [vmem:[#allocation2 + $0x370] sm:$0xf]
    %v563 = vld [vmem:[#allocation2 + $0x374] sm:$0xf]
    %v564 = vld [vmem:[#allocation2 + $0x378] sm:$0xf]
    %v565 = vld [vmem:[#allocation2 + $0x37c] sm:$0xf]
    %v566 = vld [vmem:[#allocation2 + $0x380] sm:$0xf]
    %v567 = vld [vmem:[#allocation2 + $0x384] sm:$0xf]
    %v568 = vld [vmem:[#allocation2 + $0x388] sm:$0xf]
    %v569 = vld [vmem:[#allocation2 + $0x38c] sm:$0xf]
    %v570 = vld [vmem:[#allocation2 + $0x390] sm:$0xf]
    %v571 = vld [vmem:[#allocation2 + $0x394] sm:$0xf]
    %v572 = vld [vmem:[#allocation2 + $0x398] sm:$0xf]
    %v573 = vld [vmem:[#allocation2 + $0x39c] sm:$0xf]
    %v574 = vld [vmem:[#allocation2 + $0x3a0] sm:$0xf]
    %v575 = vld [vmem:[#allocation2 + $0x3a4] sm:$0xf]
    %v576 = vld [vmem:[#allocation2 + $0x3a8] sm:$0xf]
    %v577 = vld [vmem:[#allocation2 + $0x3ac] sm:$0xf]
    %v578 = vld [vmem:[#allocation2 + $0x3b0] sm:$0xf]
    %v579 = vld [vmem:[#allocation2 + $0x3b4] sm:$0xf]
    %v580 = vld [vmem:[#allocation2 + $0x3b8] sm:$0xf]
    %v581 = vld [vmem:[#allocation2 + $0x3bc] sm:$0xf]
    %v582 = vld [vmem:[#allocation2 + $0x3c0] sm:$0xf]
    %v583 = vld [vmem:[#allocation2 + $0x3c4] sm:$0xf]
    %v584 = vld [vmem:[#allocation2 + $0x3c8] sm:$0xf]
    %v585 = vld [vmem:[#allocation2 + $0x3cc] sm:$0xf]
    %v586 = vld [vmem:[#allocation2 + $0x3d0] sm:$0xf]
    %v587 = vld [vmem:[#allocation2 + $0x3d4] sm:$0xf]
    %v588 = vld [vmem:[#allocation2 + $0x3d8] sm:$0xf]
    %v589 = vld [vmem:[#allocation2 + $0x3dc] sm:$0xf]
    %v590 = vld [vmem:[#allocation2 + $0x3e0] sm:$0xf]
    %v591 = vld [vmem:[#allocation2 + $0x3e4] sm:$0xf]
    %v592 = vld [vmem:[#allocation2 + $0x3e8] sm:$0xf]
    %v593 = vld [vmem:[#allocation2 + $0x3ec] sm:$0xf]
    %v594 = vld [vmem:[#allocation2 + $0x3f0] sm:$0xf]
    %v595 = vld [vmem:[#allocation2 + $0x3f4] sm:$0xf]
    %v596 = vld [vmem:[#allocation2 + $0x3f8] sm:$0xf]
    %v597 = vld [vmem:[#allocation2 + $0x3fc] sm:$0xf]
    %v598 = vld [vmem:[#allocation2 + $0x400] sm:$0xf]
    %v599 = vld [vmem:[#allocation2 + $0x404] sm:$0xf]
    %v600 = vld [vmem:[#allocation2 + $0x408] sm:$0xf]
    %v601 = vld [vmem:[#allocation2 + $0x40c] sm:$0xf]
    %v602 = vld [vmem:[#allocation2 + $0x410] sm:$0xf]
    %v603 = vld [vmem:[#allocation2 + $0x414] sm:$0xf]
    %v604 = vld [vmem:[#allocation2 + $0x418] sm:$0xf]
    %v605 = vld [vmem:[#allocation2 + $0x41c] sm:$0xf]
    %v606 = vld [vmem:[#allocation2 + $0x420] sm:$0xf]
    %v607 = vld [vmem:[#allocation2 + $0x424] sm:$0xf]
    %v608 = vld [vmem:[#allocation2 + $0x428] sm:$0xf]
    %v609 = vld [vmem:[#allocation2 + $0x42c] sm:$0xf]
    %v610 = vld [vmem:[#allocation2 + $0x430] sm:$0xf]
    %v611 = vld [vmem:[#allocation2 + $0x434] sm:$0xf]
    %v612 = vld [vmem:[#allocation2 + $0x438] sm:$0xf]
    %v613 = vld [vmem:[#allocation2 + $0x43c] sm:$0xf]
    %v614 = vld [vmem:[#allocation2 + $0x440] sm:$0xf]
    %v615 = vld [vmem:[#allocation2 + $0x444] sm:$0xf]
    %v616 = vld [vmem:[#allocation2 + $0x448] sm:$0xf]
    %v617 = vld [vmem:[#allocation2 + $0x44c] sm:$0xf]
    %v618 = vld [vmem:[#allocation2 + $0x450] sm:$0xf]
    %v619 = vld [vmem:[#allocation2 + $0x454] sm:$0xf]
    %v620 = vld [vmem:[#allocation2 + $0x458] sm:$0xf]
    %v621 = vld [vmem:[#allocation2 + $0x45c] sm:$0xf]
    %v622 = vld [vmem:[#allocation2 + $0x460] sm:$0xf]
    %v623 = vld [vmem:[#allocation2 + $0x464] sm:$0xf]
    %v624 = vld [vmem:[#allocation2 + $0x468] sm:$0xf]
    %v625 = vld [vmem:[#allocation2 + $0x46c] sm:$0xf]
    %v626 = vld [vmem:[#allocation2 + $0x470] sm:$0xf]
    %v627 = vld [vmem:[#allocation2 + $0x474] sm:$0xf]
    %v628 = vld [vmem:[#allocation2 + $0x478] sm:$0xf]
    %v629 = vld [vmem:[#allocation2 + $0x47c] sm:$0xf]
    %v630 = vld [vmem:[#allocation2 + $0x480] sm:$0xf]
    %v631 = vld [vmem:[#allocation2 + $0x484] sm:$0xf]
    %v632 = vld [vmem:[#allocation2 + $0x488] sm:$0xf]
    %v633 = vld [vmem:[#allocation2 + $0x48c] sm:$0xf]
    %v634 = vld [vmem:[#allocation2 + $0x490] sm:$0xf]
    %v635 = vld [vmem:[#allocation2 + $0x494] sm:$0xf]
    %v636 = vld [vmem:[#allocation2 + $0x498] sm:$0xf]
    %v637 = vld [vmem:[#allocation2 + $0x49c] sm:$0xf]
    %v638 = vld [vmem:[#allocation2 + $0x4a0] sm:$0xf]
    %v639 = vld [vmem:[#allocation2 + $0x4a4] sm:$0xf]
    %v640 = vld [vmem:[#allocation2 + $0x4a8] sm:$0xf]
    %v641 = vld [vmem:[#allocation2 + $0x4ac] sm:$0xf]
    %v642 = vld [vmem:[#allocation2 + $0x4b0] sm:$0xf]
    %v643 = vld [vmem:[#allocation2 + $0x4b4] sm:$0xf]
    %v644 = vld [vmem:[#allocation2 + $0x4b8] sm:$0xf]
    %v645 = vld [vmem:[#allocation2 + $0x4bc] sm:$0xf]
    %v646 = vld [vmem:[#allocation2 + $0x4c0] sm:$0xf]
    %v647 = vld [vmem:[#allocation2 + $0x4c4] sm:$0xf]
    %v648 = vld [vmem:[#allocation2 + $0x4c8] sm:$0xf]
    %v649 = vld [vmem:[#allocation2 + $0x4cc] sm:$0xf]
    %v650 = vld [vmem:[#allocation2 + $0x4d0] sm:$0xf]
    %v651 = vld [vmem:[#allocation2 + $0x4d4] sm:$0xf]
    %v652 = vld [vmem:[#allocation2 + $0x4d8] sm:$0xf]
    %v653 = vld [vmem:[#allocation2 + $0x4dc] sm:$0xf]
    %v654 = vld [vmem:[#allocation2 + $0x4e0] sm:$0xf]
    %v655 = vld [vmem:[#allocation2 + $0x4e4] sm:$0xf]
    %v656 = vld [vmem:[#allocation2 + $0x4e8] sm:$0xf]
    %v657 = vld [vmem:[#allocation2 + $0x4ec] sm:$0xf]
    %v658 = vld [vmem:[#allocation2 + $0x4f0] sm:$0xf]
    %v659 = vld [vmem:[#allocation2 + $0x4f4] sm:$0xf]
    %v660 = vld [vmem:[#allocation2 + $0x4f8] sm:$0xf]
    %v661 = vld [vmem:[#allocation2 + $0x4fc] sm:$0xf]
    %v662 = vld [vmem:[#allocation2 + $0x500] sm:$0xf]
    %v663 = vld [vmem:[#allocation2 + $0x504] sm:$0xf]
    %v664 = vld [vmem:[#allocation2 + $0x508] sm:$0xf]
    %v665 = vld [vmem:[#allocation2 + $0x50c] sm:$0xf]
    %v666 = vld [vmem:[#allocation2 + $0x510] sm:$0xf]
    %v667 = vld [vmem:[#allocation2 + $0x514] sm:$0xf]
    %v668 = vld [vmem:[#allocation2 + $0x518] sm:$0xf]
    %v669 = vld [vmem:[#allocation2 + $0x51c] sm:$0xf]
    %v670 = vld [vmem:[#allocation2 + $0x520] sm:$0xf]
    %v671 = vld [vmem:[#allocation2 + $0x524] sm:$0xf]
    %v672 = vld [vmem:[#allocation2 + $0x528] sm:$0xf]
    %v673 = vld [vmem:[#allocation2 + $0x52c] sm:$0xf]
    %v674 = vld [vmem:[#allocation2 + $0x530] sm:$0xf]
    %v675 = vld [vmem:[#allocation2 + $0x534] sm:$0xf]
    %v676 = vld [vmem:[#allocation2 + $0x538] sm:$0xf]
    %v677 = vld [vmem:[#allocation2 + $0x53c] sm:$0xf]
    %v678 = vld [vmem:[#allocation2 + $0x540] sm:$0xf]
    %v679 = vld [vmem:[#allocation2 + $0x544] sm:$0xf]
    %v680 = vld [vmem:[#allocation2 + $0x548] sm:$0xf]
    %v681 = vld [vmem:[#allocation2 + $0x54c] sm:$0xf]
    %v682 = vld [vmem:[#allocation2 + $0x550] sm:$0xf]
    %v683 = vld [vmem:[#allocation2 + $0x554] sm:$0xf]
    %v684 = vld [vmem:[#allocation2 + $0x558] sm:$0xf]
    %v685 = vld [vmem:[#allocation2 + $0x55c] sm:$0xf]
    %v686 = vld [vmem:[#allocation2 + $0x560] sm:$0xf]
    %v687 = vld [vmem:[#allocation2 + $0x564] sm:$0xf]
    %v688 = vld [vmem:[#allocation2 + $0x568] sm:$0xf]
    %v689 = vld [vmem:[#allocation2 + $0x56c] sm:$0xf]
    %v690 = vld [vmem:[#allocation2 + $0x570] sm:$0xf]
    %v691 = vld [vmem:[#allocation2 + $0x574] sm:$0xf]
    %v692 = vld [vmem:[#allocation2 + $0x578] sm:$0xf]
    %v693 = vld [vmem:[#allocation2 + $0x57c] sm:$0xf]
    %v694 = vld [vmem:[#allocation2 + $0x580] sm:$0xf]
    %v695 = vld [vmem:[#allocation2 + $0x584] sm:$0xf]
    %v696 = vld [vmem:[#allocation2 + $0x588] sm:$0xf]
    %v697 = vld [vmem:[#allocation2 + $0x58c] sm:$0xf]
    %v698 = vld [vmem:[#allocation2 + $0x590] sm:$0xf]
    %v699 = vld [vmem:[#allocation2 + $0x594] sm:$0xf]
    %v700 = vld [vmem:[#allocation2 + $0x598] sm:$0xf]
    %v701 = vld [vmem:[#allocation2 + $0x59c] sm:$0xf]
    %v702 = vld [vmem:[#allocation2 + $0x5a0] sm:$0xf]
    %v703 = vld [vmem:[#allocation2 + $0x5a4] sm:$0xf]
    %v704 = vld [vmem:[#allocation2 + $0x5a8] sm:$0xf]
    %v705 = vld [vmem:[#allocation2 + $0x5ac] sm:$0xf]
    %v706 = vld [vmem:[#allocation2 + $0x5b0] sm:$0xf]
    %v707 = vld [vmem:[#allocation2 + $0x5b4] sm:$0xf]
    %v708 = vld [vmem:[#allocation2 + $0x5b8] sm:$0xf]
    %v709 = vld [vmem:[#allocation2 + $0x5bc] sm:$0xf]
    %v710 = vld [vmem:[#allocation2 + $0x5c0] sm:$0xf]
    %v711 = vld [vmem:[#allocation2 + $0x5c4] sm:$0xf]
    %v712 = vld [vmem:[#allocation2 + $0x5c8] sm:$0xf]
    %v713 = vld [vmem:[#allocation2 + $0x5cc] sm:$0xf]
    %v714 = vld [vmem:[#allocation2 + $0x5d0] sm:$0xf]
    %v715 = vld [vmem:[#allocation2 + $0x5d4] sm:$0xf]
    %v716 = vld [vmem:[#allocation2 + $0x5d8] sm:$0xf]
    %v717 = vld [vmem:[#allocation2 + $0x5dc] sm:$0xf]
    %v718 = vld [vmem:[#allocation2 + $0x5e0] sm:$0xf]
    %v719 = vld [vmem:[#allocation2 + $0x5e4] sm:$0xf]
    %v720 = vld [vmem:[#allocation2 + $0x5e8] sm:$0xf]
    %v721 = vld [vmem:[#allocation2 + $0x5ec] sm:$0xf]
    %v722 = vld [vmem:[#allocation2 + $0x5f0] sm:$0xf]
    %v723 = vld [vmem:[#allocation2 + $0x5f4] sm:$0xf]
    %v724 = vld [vmem:[#allocation2 + $0x5f8] sm:$0xf]
    %v725 = vld [vmem:[#allocation2 + $0x5fc] sm:$0xf]
    %v726 = vld [vmem:[%s2] sm:$0x1]
    %v728 = vlaneseq
    %v729 = vshrl.u32 %v728, 7
    %v730 = vsub.s32 0, %v729
    %v731 = vrot.slane %v726, %v730
    %v1117 = vunpack.c.l.b16 %v342
    %v1118 = vunpack.c.l.b16 %v343
    %v1119 = vunpack.c.l.b16 %v344
    %v1120 = vunpack.c.l.b16 %v345
    %v1121 = vunpack.c.l.b16 %v346
    %v1122 = vunpack.c.l.b16 %v347
    %v1123 = vunpack.c.l.b16 %v348
    %v1124 = vunpack.c.l.b16 %v349
    %v1125 = vunpack.c.l.b16 %v350
    %v1126 = vunpack.c.l.b16 %v351
    %v1127 = vunpack.c.l.b16 %v352
    %v1128 = vunpack.c.l.b16 %v353
    %v1129 = vunpack.c.l.b16 %v354
    %v1130 = vunpack.c.l.b16 %v355
    %v1131 = vunpack.c.l.b16 %v356
    %v1132 = vunpack.c.l.b16 %v357
    %v1133 = vunpack.c.l.b16 %v358
    %v1134 = vunpack.c.l.b16 %v359
    %v1135 = vunpack.c.l.b16 %v360
    %v1136 = vunpack.c.l.b16 %v361
    %v1137 = vunpack.c.l.b16 %v362
    %v1138 = vunpack.c.l.b16 %v363
    %v1139 = vunpack.c.l.b16 %v364
    %v1140 = vunpack.c.l.b16 %v365
    %v1141 = vunpack.c.l.b16 %v366
    %v1142 = vunpack.c.l.b16 %v367
    %v1143 = vunpack.c.l.b16 %v368
    %v1144 = vunpack.c.l.b16 %v369
    %v1145 = vunpack.c.l.b16 %v370
    %v1146 = vunpack.c.l.b16 %v371
    %v1147 = vunpack.c.l.b16 %v372
    %v1148 = vunpack.c.l.b16 %v373
    %v1149 = vunpack.c.l.b16 %v374
    %v1150 = vunpack.c.l.b16 %v375
    %v1151 = vunpack.c.l.b16 %v376
    %v1152 = vunpack.c.l.b16 %v377
    %v1153 = vunpack.c.l.b16 %v378
    %v1154 = vunpack.c.l.b16 %v379
    %v1155 = vunpack.c.l.b16 %v380
    %v1156 = vunpack.c.l.b16 %v381
    %v1157 = vunpack.c.l.b16 %v382
    %v1158 = vunpack.c.l.b16 %v383
    %v1159 = vunpack.c.l.b16 %v384
    %v1160 = vunpack.c.l.b16 %v385
    %v1161 = vunpack.c.l.b16 %v386
    %v1162 = vunpack.c.l.b16 %v387
    %v1163 = vunpack.c.l.b16 %v388
    %v1164 = vunpack.c.l.b16 %v389
    %v1165 = vunpack.c.l.b16 %v390
    %v1166 = vunpack.c.l.b16 %v391
    %v1167 = vunpack.c.l.b16 %v392
    %v1168 = vunpack.c.l.b16 %v393
    %v1169 = vunpack.c.l.b16 %v394
    %v1170 = vunpack.c.l.b16 %v395
    %v1171 = vunpack.c.l.b16 %v396
    %v1172 = vunpack.c.l.b16 %v397
    %v1173 = vunpack.c.l.b16 %v398
    %v1174 = vunpack.c.l.b16 %v399
    %v1175 = vunpack.c.l.b16 %v400
    %v1176 = vunpack.c.l.b16 %v401
    %v1177 = vunpack.c.l.b16 %v402
    %v1178 = vunpack.c.l.b16 %v403
    %v1179 = vunpack.c.l.b16 %v404
    %v1180 = vunpack.c.l.b16 %v405
    %v1181 = vunpack.c.l.b16 %v406
    %v1182 = vunpack.c.l.b16 %v407
    %v1183 = vunpack.c.l.b16 %v408
    %v1184 = vunpack.c.l.b16 %v409
    %v1185 = vunpack.c.l.b16 %v410
    %v1186 = vunpack.c.l.b16 %v411
    %v1187 = vunpack.c.l.b16 %v412
    %v1188 = vunpack.c.l.b16 %v413
    %v1189 = vunpack.c.l.b16 %v414
    %v1190 = vunpack.c.l.b16 %v415
    %v1191 = vunpack.c.l.b16 %v416
    %v1192 = vunpack.c.l.b16 %v417
    %v1193 = vunpack.c.l.b16 %v418
    %v1194 = vunpack.c.l.b16 %v419
    %v1195 = vunpack.c.l.b16 %v420
    %v1196 = vunpack.c.l.b16 %v421
    %v1197 = vunpack.c.l.b16 %v422
    %v1198 = vunpack.c.l.b16 %v423
    %v1199 = vunpack.c.l.b16 %v424
    %v1200 = vunpack.c.l.b16 %v425
    %v1201 = vunpack.c.l.b16 %v426
    %v1202 = vunpack.c.l.b16 %v427
    %v1203 = vunpack.c.l.b16 %v428
    %v1204 = vunpack.c.l.b16 %v429
    %v1205 = vunpack.c.l.b16 %v430
    %v1206 = vunpack.c.l.b16 %v431
    %v1207 = vunpack.c.l.b16 %v432
    %v1208 = vunpack.c.l.b16 %v433
    %v1209 = vunpack.c.l.b16 %v434
    %v1210 = vunpack.c.l.b16 %v435
    %v1211 = vunpack.c.l.b16 %v436
    %v1212 = vunpack.c.l.b16 %v437
    %v1213 = vunpack.c.l.b16 %v438
    %v1214 = vunpack.c.l.b16 %v439
    %v1215 = vunpack.c.l.b16 %v440
    %v1216 = vunpack.c.l.b16 %v441
    %v1217 = vunpack.c.l.b16 %v442
    %v1218 = vunpack.c.l.b16 %v443
    %v1219 = vunpack.c.l.b16 %v444
    %v1220 = vunpack.c.l.b16 %v445
    %v1221 = vunpack.c.l.b16 %v446
    %v1222 = vunpack.c.l.b16 %v447
    %v1223 = vunpack.c.l.b16 %v448
    %v1224 = vunpack.c.l.b16 %v449
    %v1225 = vunpack.c.l.b16 %v450
    %v1226 = vunpack.c.l.b16 %v451
    %v1227 = vunpack.c.l.b16 %v452
    %v1228 = vunpack.c.l.b16 %v453
    %v1229 = vunpack.c.l.b16 %v454
    %v1230 = vunpack.c.l.b16 %v455
    %v1231 = vunpack.c.l.b16 %v456
    %v1232 = vunpack.c.l.b16 %v457
    %v1233 = vunpack.c.l.b16 %v458
    %v1234 = vunpack.c.l.b16 %v459
    %v1235 = vunpack.c.l.b16 %v460
    %v1236 = vunpack.c.l.b16 %v461
    %v1237 = vunpack.c.l.b16 %v462
    %v1238 = vunpack.c.l.b16 %v463
    %v1239 = vunpack.c.l.b16 %v464
    %v1240 = vunpack.c.l.b16 %v465
    %v1241 = vunpack.c.l.b16 %v466
    %v1242 = vunpack.c.l.b16 %v467
    %v1243 = vunpack.c.l.b16 %v468
    %v1244 = vunpack.c.l.b16 %v469
    %v1245 = vunpack.c.l.b16 %v470
    %v1246 = vunpack.c.l.b16 %v471
    %v1247 = vunpack.c.l.b16 %v472
    %v1248 = vunpack.c.l.b16 %v473
    %v1249 = vunpack.c.l.b16 %v474
    %v1250 = vunpack.c.l.b16 %v475
    %v1251 = vunpack.c.l.b16 %v476
    %v1252 = vunpack.c.l.b16 %v477
    %v1253 = vunpack.c.l.b16 %v478
    %v1254 = vunpack.c.l.b16 %v479
    %v1255 = vunpack.c.l.b16 %v480
    %v1256 = vunpack.c.l.b16 %v481
    %v1257 = vunpack.c.l.b16 %v482
    %v1258 = vunpack.c.l.b16 %v483
    %v1259 = vunpack.c.l.b16 %v484
    %v1260 = vunpack.c.l.b16 %v485
    %v1261 = vunpack.c.l.b16 %v486
    %v1262 = vunpack.c.l.b16 %v487
    %v1263 = vunpack.c.l.b16 %v488
    %v1264 = vunpack.c.l.b16 %v489
    %v1265 = vunpack.c.l.b16 %v490
    %v1266 = vunpack.c.l.b16 %v491
    %v1267 = vunpack.c.l.b16 %v492
    %v1268 = vunpack.c.l.b16 %v493
    %v1269 = vunpack.c.l.b16 %v494
    %v1270 = vunpack.c.l.b16 %v495
    %v1271 = vunpack.c.l.b16 %v496
    %v1272 = vunpack.c.l.b16 %v497
    %v1273 = vunpack.c.l.b16 %v498
    %v1274 = vunpack.c.l.b16 %v499
    %v1275 = vunpack.c.l.b16 %v500
    %v1276 = vunpack.c.l.b16 %v501
    %v1277 = vunpack.c.l.b16 %v502
    %v1278 = vunpack.c.l.b16 %v503
    %v1279 = vunpack.c.l.b16 %v504
    %v1280 = vunpack.c.l.b16 %v505
    %v1281 = vunpack.c.l.b16 %v506
    %v1282 = vunpack.c.l.b16 %v507
    %v1283 = vunpack.c.l.b16 %v508
    %v1284 = vunpack.c.l.b16 %v509
    %v1285 = vunpack.c.l.b16 %v510
    %v1286 = vunpack.c.l.b16 %v511
    %v1287 = vunpack.c.l.b16 %v512
    %v1288 = vunpack.c.l.b16 %v513
    %v1289 = vunpack.c.l.b16 %v514
    %v1290 = vunpack.c.l.b16 %v515
    %v1291 = vunpack.c.l.b16 %v516
    %v1292 = vunpack.c.l.b16 %v517
    %v1293 = vunpack.c.l.b16 %v518
    %v1294 = vunpack.c.l.b16 %v519
    %v1295 = vunpack.c.l.b16 %v520
    %v1296 = vunpack.c.l.b16 %v521
    %v1297 = vunpack.c.l.b16 %v522
    %v1298 = vunpack.c.l.b16 %v523
    %v1299 = vunpack.c.l.b16 %v524
    %v1300 = vunpack.c.l.b16 %v525
    %v1301 = vunpack.c.l.b16 %v526
    %v1302 = vunpack.c.l.b16 %v527
    %v1303 = vunpack.c.l.b16 %v528
    %v1304 = vunpack.c.l.b16 %v529
    %v1305 = vunpack.c.l.b16 %v530
    %v1306 = vunpack.c.l.b16 %v531
    %v1307 = vunpack.c.l.b16 %v532
    %v1308 = vunpack.c.l.b16 %v533
    %v1309 = vunpack.c.l.b16 %v534
    %v1310 = vunpack.c.l.b16 %v535
    %v1311 = vunpack.c.l.b16 %v536
    %v1312 = vunpack.c.l.b16 %v537
    %v1313 = vunpack.c.l.b16 %v538
    %v1314 = vunpack.c.l.b16 %v539
    %v1315 = vunpack.c.l.b16 %v540
    %v1316 = vunpack.c.l.b16 %v541
    %v1317 = vunpack.c.l.b16 %v542
    %v1318 = vunpack.c.l.b16 %v543
    %v1319 = vunpack.c.l.b16 %v544
    %v1320 = vunpack.c.l.b16 %v545
    %v1321 = vunpack.c.l.b16 %v546
    %v1322 = vunpack.c.l.b16 %v547
    %v1323 = vunpack.c.l.b16 %v548
    %v1324 = vunpack.c.l.b16 %v549
    %v1325 = vunpack.c.l.b16 %v550
    %v1326 = vunpack.c.l.b16 %v551
    %v1327 = vunpack.c.l.b16 %v552
    %v1328 = vunpack.c.l.b16 %v553
    %v1329 = vunpack.c.l.b16 %v554
    %v1330 = vunpack.c.l.b16 %v555
    %v1331 = vunpack.c.l.b16 %v556
    %v1332 = vunpack.c.l.b16 %v557
    %v1333 = vunpack.c.l.b16 %v558
    %v1334 = vunpack.c.l.b16 %v559
    %v1335 = vunpack.c.l.b16 %v560
    %v1336 = vunpack.c.l.b16 %v561
    %v1337 = vunpack.c.l.b16 %v562
    %v1338 = vunpack.c.l.b16 %v563
    %v1339 = vunpack.c.l.b16 %v564
    %v1340 = vunpack.c.l.b16 %v565
    %v1341 = vunpack.c.l.b16 %v566
    %v1342 = vunpack.c.l.b16 %v567
    %v1343 = vunpack.c.l.b16 %v568
    %v1344 = vunpack.c.l.b16 %v569
    %v1345 = vunpack.c.l.b16 %v570
    %v1346 = vunpack.c.l.b16 %v571
    %v1347 = vunpack.c.l.b16 %v572
    %v1348 = vunpack.c.l.b16 %v573
    %v1349 = vunpack.c.l.b16 %v574
    %v1350 = vunpack.c.l.b16 %v575
    %v1351 = vunpack.c.l.b16 %v576
    %v1352 = vunpack.c.l.b16 %v577
    %v1353 = vunpack.c.l.b16 %v578
    %v1354 = vunpack.c.l.b16 %v579
    %v1355 = vunpack.c.l.b16 %v580
    %v1356 = vunpack.c.l.b16 %v581
    %v1357 = vunpack.c.l.b16 %v582
    %v1358 = vunpack.c.l.b16 %v583
    %v1359 = vunpack.c.l.b16 %v584
    %v1360 = vunpack.c.l.b16 %v585
    %v1361 = vunpack.c.l.b16 %v586
    %v1362 = vunpack.c.l.b16 %v587
    %v1363 = vunpack.c.l.b16 %v588
    %v1364 = vunpack.c.l.b16 %v589
    %v1365 = vunpack.c.l.b16 %v590
    %v1366 = vunpack.c.l.b16 %v591
    %v1367 = vunpack.c.l.b16 %v592
    %v1368 = vunpack.c.l.b16 %v593
    %v1369 = vunpack.c.l.b16 %v594
    %v1370 = vunpack.c.l.b16 %v595
    %v1371 = vunpack.c.l.b16 %v596
    %v1372 = vunpack.c.l.b16 %v597
    %v1373 = vunpack.c.l.b16 %v598
    %v1374 = vunpack.c.l.b16 %v599
    %v1375 = vunpack.c.l.b16 %v600
    %v1376 = vunpack.c.l.b16 %v601
    %v1377 = vunpack.c.l.b16 %v602
    %v1378 = vunpack.c.l.b16 %v603
    %v1379 = vunpack.c.l.b16 %v604
    %v1380 = vunpack.c.l.b16 %v605
    %v1381 = vunpack.c.l.b16 %v606
    %v1382 = vunpack.c.l.b16 %v607
    %v1383 = vunpack.c.l.b16 %v608
    %v1384 = vunpack.c.l.b16 %v609
    %v1385 = vunpack.c.l.b16 %v610
    %v1386 = vunpack.c.l.b16 %v611
    %v1387 = vunpack.c.l.b16 %v612
    %v1388 = vunpack.c.l.b16 %v613
    %v1389 = vunpack.c.l.b16 %v614
    %v1390 = vunpack.c.l.b16 %v615
    %v1391 = vunpack.c.l.b16 %v616
    %v1392 = vunpack.c.l.b16 %v617
    %v1393 = vunpack.c.l.b16 %v618
    %v1394 = vunpack.c.l.b16 %v619
    %v1395 = vunpack.c.l.b16 %v620
    %v1396 = vunpack.c.l.b16 %v621
    %v1397 = vunpack.c.l.b16 %v622
    %v1398 = vunpack.c.l.b16 %v623
    %v1399 = vunpack.c.l.b16 %v624
    %v1400 = vunpack.c.l.b16 %v625
    %v1401 = vunpack.c.l.b16 %v626
    %v1402 = vunpack.c.l.b16 %v627
    %v1403 = vunpack.c.l.b16 %v628
    %v1404 = vunpack.c.l.b16 %v629
    %v1405 = vunpack.c.l.b16 %v630
    %v1406 = vunpack.c.l.b16 %v631
    %v1407 = vunpack.c.l.b16 %v632
    %v1408 = vunpack.c.l.b16 %v633
    %v1409 = vunpack.c.l.b16 %v634
    %v1410 = vunpack.c.l.b16 %v635
    %v1411 = vunpack.c.l.b16 %v636
    %v1412 = vunpack.c.l.b16 %v637
    %v1413 = vunpack.c.l.b16 %v638
    %v1414 = vunpack.c.l.b16 %v639
    %v1415 = vunpack.c.l.b16 %v640
    %v1416 = vunpack.c.l.b16 %v641
    %v1417 = vunpack.c.l.b16 %v642
    %v1418 = vunpack.c.l.b16 %v643
    %v1419 = vunpack.c.l.b16 %v644
    %v1420 = vunpack.c.l.b16 %v645
    %v1421 = vunpack.c.l.b16 %v646
    %v1422 = vunpack.c.l.b16 %v647
    %v1423 = vunpack.c.l.b16 %v648
    %v1424 = vunpack.c.l.b16 %v649
    %v1425 = vunpack.c.l.b16 %v650
    %v1426 = vunpack.c.l.b16 %v651
    %v1427 = vunpack.c.l.b16 %v652
    %v1428 = vunpack.c.l.b16 %v653
    %v1429 = vunpack.c.l.b16 %v654
    %v1430 = vunpack.c.l.b16 %v655
    %v1431 = vunpack.c.l.b16 %v656
    %v1432 = vunpack.c.l.b16 %v657
    %v1433 = vunpack.c.l.b16 %v658
    %v1434 = vunpack.c.l.b16 %v659
    %v1435 = vunpack.c.l.b16 %v660
    %v1436 = vunpack.c.l.b16 %v661
    %v1437 = vunpack.c.l.b16 %v662
    %v1438 = vunpack.c.l.b16 %v663
    %v1439 = vunpack.c.l.b16 %v664
    %v1440 = vunpack.c.l.b16 %v665
    %v1441 = vunpack.c.l.b16 %v666
    %v1442 = vunpack.c.l.b16 %v667
    %v1443 = vunpack.c.l.b16 %v668
    %v1444 = vunpack.c.l.b16 %v669
    %v1445 = vunpack.c.l.b16 %v670
    %v1446 = vunpack.c.l.b16 %v671
    %v1447 = vunpack.c.l.b16 %v672
    %v1448 = vunpack.c.l.b16 %v673
    %v1449 = vunpack.c.l.b16 %v674
    %v1450 = vunpack.c.l.b16 %v675
    %v1451 = vunpack.c.l.b16 %v676
    %v1452 = vunpack.c.l.b16 %v677
    %v1453 = vunpack.c.l.b16 %v678
    %v1454 = vunpack.c.l.b16 %v679
    %v1455 = vunpack.c.l.b16 %v680
    %v1456 = vunpack.c.l.b16 %v681
    %v1457 = vunpack.c.l.b16 %v682
    %v1458 = vunpack.c.l.b16 %v683
    %v1459 = vunpack.c.l.b16 %v684
    %v1460 = vunpack.c.l.b16 %v685
    %v1461 = vunpack.c.l.b16 %v686
    %v1462 = vunpack.c.l.b16 %v687
    %v1463 = vunpack.c.l.b16 %v688
    %v1464 = vunpack.c.l.b16 %v689
    %v1465 = vunpack.c.l.b16 %v690
    %v1466 = vunpack.c.l.b16 %v691
    %v1467 = vunpack.c.l.b16 %v692
    %v1468 = vunpack.c.l.b16 %v693
    %v1469 = vunpack.c.l.b16 %v694
    %v1470 = vunpack.c.l.b16 %v695
    %v1471 = vunpack.c.l.b16 %v696
    %v1472 = vunpack.c.l.b16 %v697
    %v1473 = vunpack.c.l.b16 %v698
    %v1474 = vunpack.c.l.b16 %v699
    %v1475 = vunpack.c.l.b16 %v700
    %v1476 = vunpack.c.l.b16 %v701
    %v1477 = vunpack.c.l.b16 %v702
    %v1478 = vunpack.c.l.b16 %v703
    %v1479 = vunpack.c.l.b16 %v704
    %v1480 = vunpack.c.l.b16 %v705
    %v1481 = vunpack.c.l.b16 %v706
    %v1482 = vunpack.c.l.b16 %v707
    %v1483 = vunpack.c.l.b16 %v708
    %v1484 = vunpack.c.l.b16 %v709
    %v1485 = vunpack.c.l.b16 %v710
    %v1486 = vunpack.c.l.b16 %v711
    %v1487 = vunpack.c.l.b16 %v712
    %v1488 = vunpack.c.l.b16 %v713
    %v1489 = vunpack.c.l.b16 %v714
    %v1490 = vunpack.c.l.b16 %v715
    %v1491 = vunpack.c.l.b16 %v716
    %v1492 = vunpack.c.l.b16 %v717
    %v1493 = vunpack.c.l.b16 %v718
    %v1494 = vunpack.c.l.b16 %v719
    %v1495 = vunpack.c.l.b16 %v720
    %v1496 = vunpack.c.l.b16 %v721
    %v1497 = vunpack.c.l.b16 %v722
    %v1498 = vunpack.c.l.b16 %v723
    %v1499 = vunpack.c.l.b16 %v724
    %v1500 = vunpack.c.l.b16 %v725
    %v1501 = vpack.c.b16 %v1118, %v1117
    %v1502 = vpack.c.b16 %v1120, %v1119
    %v1503 = vpack.c.b16 %v1122, %v1121
    %v1504 = vpack.c.b16 %v1124, %v1123
    %v1505 = vpack.c.b16 %v1126, %v1125
    %v1506 = vpack.c.b16 %v1128, %v1127
    %v1507 = vpack.c.b16 %v1130, %v1129
    %v1508 = vpack.c.b16 %v1132, %v1131
    %v1509 = vpack.c.b16 %v1134, %v1133
    %v1510 = vpack.c.b16 %v1136, %v1135
    %v1511 = vpack.c.b16 %v1138, %v1137
    %v1512 = vpack.c.b16 %v1140, %v1139
    %v1513 = vpack.c.b16 %v1142, %v1141
    %v1514 = vpack.c.b16 %v1144, %v1143
    %v1515 = vpack.c.b16 %v1146, %v1145
    %v1516 = vpack.c.b16 %v1148, %v1147
    %v1517 = vpack.c.b16 %v1150, %v1149
    %v1518 = vpack.c.b16 %v1152, %v1151
    %v1519 = vpack.c.b16 %v1154, %v1153
    %v1520 = vpack.c.b16 %v1156, %v1155
    %v1521 = vpack.c.b16 %v1158, %v1157
    %v1522 = vpack.c.b16 %v1160, %v1159
    %v1523 = vpack.c.b16 %v1162, %v1161
    %v1524 = vpack.c.b16 %v1164, %v1163
    %v1525 = vpack.c.b16 %v1166, %v1165
    %v1526 = vpack.c.b16 %v1168, %v1167
    %v1527 = vpack.c.b16 %v1170, %v1169
    %v1528 = vpack.c.b16 %v1172, %v1171
    %v1529 = vpack.c.b16 %v1174, %v1173
    %v1530 = vpack.c.b16 %v1176, %v1175
    %v1531 = vpack.c.b16 %v1178, %v1177
    %v1532 = vpack.c.b16 %v1180, %v1179
    %v1533 = vpack.c.b16 %v1182, %v1181
    %v1534 = vpack.c.b16 %v1184, %v1183
    %v1535 = vpack.c.b16 %v1186, %v1185
    %v1536 = vpack.c.b16 %v1188, %v1187
    %v1537 = vpack.c.b16 %v1190, %v1189
    %v1538 = vpack.c.b16 %v1192, %v1191
    %v1539 = vpack.c.b16 %v1194, %v1193
    %v1540 = vpack.c.b16 %v1196, %v1195
    %v1541 = vpack.c.b16 %v1198, %v1197
    %v1542 = vpack.c.b16 %v1200, %v1199
    %v1543 = vpack.c.b16 %v1202, %v1201
    %v1544 = vpack.c.b16 %v1204, %v1203
    %v1545 = vpack.c.b16 %v1206, %v1205
    %v1546 = vpack.c.b16 %v1208, %v1207
    %v1547 = vpack.c.b16 %v1210, %v1209
    %v1548 = vpack.c.b16 %v1212, %v1211
    %v1549 = vpack.c.b16 %v1214, %v1213
    %v1550 = vpack.c.b16 %v1216, %v1215
    %v1551 = vpack.c.b16 %v1218, %v1217
    %v1552 = vpack.c.b16 %v1220, %v1219
    %v1553 = vpack.c.b16 %v1222, %v1221
    %v1554 = vpack.c.b16 %v1224, %v1223
    %v1555 = vpack.c.b16 %v1226, %v1225
    %v1556 = vpack.c.b16 %v1228, %v1227
    %v1557 = vpack.c.b16 %v1230, %v1229
    %v1558 = vpack.c.b16 %v1232, %v1231
    %v1559 = vpack.c.b16 %v1234, %v1233
    %v1560 = vpack.c.b16 %v1236, %v1235
    %v1561 = vpack.c.b16 %v1238, %v1237
    %v1562 = vpack.c.b16 %v1240, %v1239
    %v1563 = vpack.c.b16 %v1242, %v1241
    %v1564 = vpack.c.b16 %v1244, %v1243
    %v1565 = vpack.c.b16 %v1246, %v1245
    %v1566 = vpack.c.b16 %v1248, %v1247
    %v1567 = vpack.c.b16 %v1250, %v1249
    %v1568 = vpack.c.b16 %v1252, %v1251
    %v1569 = vpack.c.b16 %v1254, %v1253
    %v1570 = vpack.c.b16 %v1256, %v1255
    %v1571 = vpack.c.b16 %v1258, %v1257
    %v1572 = vpack.c.b16 %v1260, %v1259
    %v1573 = vpack.c.b16 %v1262, %v1261
    %v1574 = vpack.c.b16 %v1264, %v1263
    %v1575 = vpack.c.b16 %v1266, %v1265
    %v1576 = vpack.c.b16 %v1268, %v1267
    %v1577 = vpack.c.b16 %v1270, %v1269
    %v1578 = vpack.c.b16 %v1272, %v1271
    %v1579 = vpack.c.b16 %v1274, %v1273
    %v1580 = vpack.c.b16 %v1276, %v1275
    %v1581 = vpack.c.b16 %v1278, %v1277
    %v1582 = vpack.c.b16 %v1280, %v1279
    %v1583 = vpack.c.b16 %v1282, %v1281
    %v1584 = vpack.c.b16 %v1284, %v1283
    %v1585 = vpack.c.b16 %v1286, %v1285
    %v1586 = vpack.c.b16 %v1288, %v1287
    %v1587 = vpack.c.b16 %v1290, %v1289
    %v1588 = vpack.c.b16 %v1292, %v1291
    %v1589 = vpack.c.b16 %v1294, %v1293
    %v1590 = vpack.c.b16 %v1296, %v1295
    %v1591 = vpack.c.b16 %v1298, %v1297
    %v1592 = vpack.c.b16 %v1300, %v1299
    %v1593 = vpack.c.b16 %v1302, %v1301
    %v1594 = vpack.c.b16 %v1304, %v1303
    %v1595 = vpack.c.b16 %v1306, %v1305
    %v1596 = vpack.c.b16 %v1308, %v1307
    %v1597 = vpack.c.b16 %v1310, %v1309
    %v1598 = vpack.c.b16 %v1312, %v1311
    %v1599 = vpack.c.b16 %v1314, %v1313
    %v1600 = vpack.c.b16 %v1316, %v1315
    %v1601 = vpack.c.b16 %v1318, %v1317
    %v1602 = vpack.c.b16 %v1320, %v1319
    %v1603 = vpack.c.b16 %v1322, %v1321
    %v1604 = vpack.c.b16 %v1324, %v1323
    %v1605 = vpack.c.b16 %v1326, %v1325
    %v1606 = vpack.c.b16 %v1328, %v1327
    %v1607 = vpack.c.b16 %v1330, %v1329
    %v1608 = vpack.c.b16 %v1332, %v1331
    %v1609 = vpack.c.b16 %v1334, %v1333
    %v1610 = vpack.c.b16 %v1336, %v1335
    %v1611 = vpack.c.b16 %v1338, %v1337
    %v1612 = vpack.c.b16 %v1340, %v1339
    %v1613 = vpack.c.b16 %v1342, %v1341
    %v1614 = vpack.c.b16 %v1344, %v1343
    %v1615 = vpack.c.b16 %v1346, %v1345
    %v1616 = vpack.c.b16 %v1348, %v1347
    %v1617 = vpack.c.b16 %v1350, %v1349
    %v1618 = vpack.c.b16 %v1352, %v1351
    %v1619 = vpack.c.b16 %v1354, %v1353
    %v1620 = vpack.c.b16 %v1356, %v1355
    %v1621 = vpack.c.b16 %v1358, %v1357
    %v1622 = vpack.c.b16 %v1360, %v1359
    %v1623 = vpack.c.b16 %v1362, %v1361
    %v1624 = vpack.c.b16 %v1364, %v1363
    %v1625 = vpack.c.b16 %v1366, %v1365
    %v1626 = vpack.c.b16 %v1368, %v1367
    %v1627 = vpack.c.b16 %v1370, %v1369
    %v1628 = vpack.c.b16 %v1372, %v1371
    %v1629 = vpack.c.b16 %v1374, %v1373
    %v1630 = vpack.c.b16 %v1376, %v1375
    %v1631 = vpack.c.b16 %v1378, %v1377
    %v1632 = vpack.c.b16 %v1380, %v1379
    %v1633 = vpack.c.b16 %v1382, %v1381
    %v1634 = vpack.c.b16 %v1384, %v1383
    %v1635 = vpack.c.b16 %v1386, %v1385
    %v1636 = vpack.c.b16 %v1388, %v1387
    %v1637 = vpack.c.b16 %v1390, %v1389
    %v1638 = vpack.c.b16 %v1392, %v1391
    %v1639 = vpack.c.b16 %v1394, %v1393
    %v1640 = vpack.c.b16 %v1396, %v1395
    %v1641 = vpack.c.b16 %v1398, %v1397
    %v1642 = vpack.c.b16 %v1400, %v1399
    %v1643 = vpack.c.b16 %v1402, %v1401
    %v1644 = vpack.c.b16 %v1404, %v1403
    %v1645 = vpack.c.b16 %v1406, %v1405
    %v1646 = vpack.c.b16 %v1408, %v1407
    %v1647 = vpack.c.b16 %v1410, %v1409
    %v1648 = vpack.c.b16 %v1412, %v1411
    %v1649 = vpack.c.b16 %v1414, %v1413
    %v1650 = vpack.c.b16 %v1416, %v1415
    %v1651 = vpack.c.b16 %v1418, %v1417
    %v1652 = vpack.c.b16 %v1420, %v1419
    %v1653 = vpack.c.b16 %v1422, %v1421
    %v1654 = vpack.c.b16 %v1424, %v1423
    %v1655 = vpack.c.b16 %v1426, %v1425
    %v1656 = vpack.c.b16 %v1428, %v1427
    %v1657 = vpack.c.b16 %v1430, %v1429
    %v1658 = vpack.c.b16 %v1432, %v1431
    %v1659 = vpack.c.b16 %v1434, %v1433
    %v1660 = vpack.c.b16 %v1436, %v1435
    %v1661 = vpack.c.b16 %v1438, %v1437
    %v1662 = vpack.c.b16 %v1440, %v1439
    %v1663 = vpack.c.b16 %v1442, %v1441
    %v1664 = vpack.c.b16 %v1444, %v1443
    %v1665 = vpack.c.b16 %v1446, %v1445
    %v1666 = vpack.c.b16 %v1448, %v1447
    %v1667 = vpack.c.b16 %v1450, %v1449
    %v1668 = vpack.c.b16 %v1452, %v1451
    %v1669 = vpack.c.b16 %v1454, %v1453
    %v1670 = vpack.c.b16 %v1456, %v1455
    %v1671 = vpack.c.b16 %v1458, %v1457
    %v1672 = vpack.c.b16 %v1460, %v1459
    %v1673 = vpack.c.b16 %v1462, %v1461
    %v1674 = vpack.c.b16 %v1464, %v1463
    %v1675 = vpack.c.b16 %v1466, %v1465
    %v1676 = vpack.c.b16 %v1468, %v1467
    %v1677 = vpack.c.b16 %v1470, %v1469
    %v1678 = vpack.c.b16 %v1472, %v1471
    %v1679 = vpack.c.b16 %v1474, %v1473
    %v1680 = vpack.c.b16 %v1476, %v1475
    %v1681 = vpack.c.b16 %v1478, %v1477
    %v1682 = vpack.c.b16 %v1480, %v1479
    %v1683 = vpack.c.b16 %v1482, %v1481
    %v1684 = vpack.c.b16 %v1484, %v1483
    %v1685 = vpack.c.b16 %v1486, %v1485
    %v1686 = vpack.c.b16 %v1488, %v1487
    %v1687 = vpack.c.b16 %v1490, %v1489
    %v1688 = vpack.c.b16 %v1492, %v1491
    %v1689 = vpack.c.b16 %v1494, %v1493
    %v1690 = vpack.c.b16 %v1496, %v1495
    %v1691 = vpack.c.b16 %v1498, %v1497
    %v1692 = vpack.c.b16 %v1500, %v1499
    %1885 = vmatprep.subr.bf16.mxu0 0
    %1886 = vmatpush1.bf16.msra.mxu0 %v1501
    %1887 = vmatprep.subr.bf16.mxu0 0
    %1888 = vmatpush1.bf16.msra.mxu0 %v1502
    %1889 = vmatprep.subr.bf16.mxu0 0
    %1890 = vmatpush1.bf16.msra.mxu0 %v1503
    %1891 = vmatprep.subr.bf16.mxu0 0
    %1892 = vmatpush1.bf16.msra.mxu0 %v1504
    %1893 = vmatprep.subr.bf16.mxu0 0
    %1894 = vmatpush1.bf16.msra.mxu0 %v1505
    %1895 = vmatprep.subr.bf16.mxu0 0
    %1896 = vmatpush1.bf16.msra.mxu0 %v1506
    %1897 = vmatprep.subr.bf16.mxu0 0
    %1898 = vmatpush1.bf16.msra.mxu0 %v1507
    %1899 = vmatprep.subr.bf16.mxu0 0
    %1900 = vmatpush1.bf16.msra.mxu0 %v1508
    %1901 = vmatprep.subr.bf16.mxu0 0
    %1902 = vmatpush1.bf16.msra.mxu0 %v1509
    %1903 = vmatprep.subr.bf16.mxu0 0
    %1904 = vmatpush1.bf16.msra.mxu0 %v1510
    %1905 = vmatprep.subr.bf16.mxu0 0
    %1906 = vmatpush1.bf16.msra.mxu0 %v1511
    %1907 = vmatprep.subr.bf16.mxu0 0
    %1908 = vmatpush1.bf16.msra.mxu0 %v1512
    %1909 = vmatprep.subr.bf16.mxu0 0
    %1910 = vmatpush1.bf16.msra.mxu0 %v1513
    %1911 = vmatprep.subr.bf16.mxu0 0
    %1912 = vmatpush1.bf16.msra.mxu0 %v1514
    %1913 = vmatprep.subr.bf16.mxu0 0
    %1914 = vmatpush1.bf16.msra.mxu0 %v1515
    %1915 = vmatprep.subr.bf16.mxu0 0
    %1916 = vmatpush1.bf16.msra.mxu0 %v1516
    %1917 = vmatprep.mubr.bf16.mxu0 %v319
    %1918 = vmatmul.mubr.bf16.gmra.mrb[0].mxu0 %v318
    %v1919 = vpop.f32.mrb[0].mxu0
    %v1920 = vadd.f32 %v731, %v1919
    %v1921 = vpop.f32.mrb[0].mxu0
    %v1922 = vpop.f32.mrb[0].mxu0
    %v1923 = vpop.f32.mrb[0].mxu0
    %1924 = vdwg.mxu0
    %1925 = vmatprep.subr.bf16.mxu0 0
    %1926 = vmatpush1.bf16.msra.mxu0 %v1517
    %1927 = vmatprep.subr.bf16.mxu0 0
    %1928 = vmatpush1.bf16.msra.mxu0 %v1518
    %1929 = vmatprep.subr.bf16.mxu0 0
    %1930 = vmatpush1.bf16.msra.mxu0 %v1519
    %1931 = vmatprep.subr.bf16.mxu0 0
    %1932 = vmatpush1.bf16.msra.mxu0 %v1520
    %1933 = vmatprep.subr.bf16.mxu0 0
    %1934 = vmatpush1.bf16.msra.mxu0 %v1521
    %1935 = vmatprep.subr.bf16.mxu0 0
    %1936 = vmatpush1.bf16.msra.mxu0 %v1522
    %1937 = vmatprep.subr.bf16.mxu0 0
    %1938 = vmatpush1.bf16.msra.mxu0 %v1523
    %1939 = vmatprep.subr.bf16.mxu0 0
    %1940 = vmatpush1.bf16.msra.mxu0 %v1524
    %1941 = vmatprep.subr.bf16.mxu0 0
    %1942 = vmatpush1.bf16.msra.mxu0 %v1525
    %1943 = vmatprep.subr.bf16.mxu0 0
    %1944 = vmatpush1.bf16.msra.mxu0 %v1526
    %1945 = vmatprep.subr.bf16.mxu0 0
    %1946 = vmatpush1.bf16.msra.mxu0 %v1527
    %1947 = vmatprep.subr.bf16.mxu0 0
    %1948 = vmatpush1.bf16.msra.mxu0 %v1528
    %1949 = vmatprep.subr.bf16.mxu0 0
    %1950 = vmatpush1.bf16.msra.mxu0 %v1529
    %1951 = vmatprep.subr.bf16.mxu0 0
    %1952 = vmatpush1.bf16.msra.mxu0 %v1530
    %1953 = vmatprep.subr.bf16.mxu0 0
    %1954 = vmatpush1.bf16.msra.mxu0 %v1531
    %1955 = vmatprep.subr.bf16.mxu0 0
    %1956 = vmatpush1.bf16.msra.mxu0 %v1532
    %1957 = vmatprep.mubr.bf16.mxu0 %v321
    %1958 = vmatmul.mubr.bf16.gmra.mrb[0].mxu0 %v320
    %v1959 = vpop.f32.mrb[0].mxu0
    %v1960 = vadd.f32 %v1920, %v1959
    %v1961 = vpop.f32.mrb[0].mxu0
    %v1962 = vpop.f32.mrb[0].mxu0
    %v1963 = vpop.f32.mrb[0].mxu0
    %1964 = vdwg.mxu0
    %1965 = vmatprep.subr.bf16.mxu0 0
    %1966 = vmatpush1.bf16.msra.mxu0 %v1533
    %1967 = vmatprep.subr.bf16.mxu0 0
    %1968 = vmatpush1.bf16.msra.mxu0 %v1534
    %1969 = vmatprep.subr.bf16.mxu0 0
    %1970 = vmatpush1.bf16.msra.mxu0 %v1535
    %1971 = vmatprep.subr.bf16.mxu0 0
    %1972 = vmatpush1.bf16.msra.mxu0 %v1536
    %1973 = vmatprep.subr.bf16.mxu0 0
    %1974 = vmatpush1.bf16.msra.mxu0 %v1537
    %1975 = vmatprep.subr.bf16.mxu0 0
    %1976 = vmatpush1.bf16.msra.mxu0 %v1538
    %1977 = vmatprep.subr.bf16.mxu0 0
    %1978 = vmatpush1.bf16.msra.mxu0 %v1539
    %1979 = vmatprep.subr.bf16.mxu0 0
    %1980 = vmatpush1.bf16.msra.mxu0 %v1540
    %1981 = vmatprep.subr.bf16.mxu0 0
    %1982 = vmatpush1.bf16.msra.mxu0 %v1541
    %1983 = vmatprep.subr.bf16.mxu0 0
    %1984 = vmatpush1.bf16.msra.mxu0 %v1542
    %1985 = vmatprep.subr.bf16.mxu0 0
    %1986 = vmatpush1.bf16.msra.mxu0 %v1543
    %1987 = vmatprep.subr.bf16.mxu0 0
    %1988 = vmatpush1.bf16.msra.mxu0 %v1544
    %1989 = vmatprep.subr.bf16.mxu0 0
    %1990 = vmatpush1.bf16.msra.mxu0 %v1545
    %1991 = vmatprep.subr.bf16.mxu0 0
    %1992 = vmatpush1.bf16.msra.mxu0 %v1546
    %1993 = vmatprep.subr.bf16.mxu0 0
    %1994 = vmatpush1.bf16.msra.mxu0 %v1547
    %1995 = vmatprep.subr.bf16.mxu0 0
    %1996 = vmatpush1.bf16.msra.mxu0 %v1548
    %1997 = vmatprep.mubr.bf16.mxu0 %v323
    %1998 = vmatmul.mubr.bf16.gmra.mrb[0].mxu0 %v322
    %v1999 = vpop.f32.mrb[0].mxu0
    %v2000 = vadd.f32 %v1960, %v1999
    %v2001 = vpop.f32.mrb[0].mxu0
    %v2002 = vpop.f32.mrb[0].mxu0
    %v2003 = vpop.f32.mrb[0].mxu0
    %2004 = vdwg.mxu0
    %2005 = vmatprep.subr.bf16.mxu0 0
    %2006 = vmatpush1.bf16.msra.mxu0 %v1549
    %2007 = vmatprep.subr.bf16.mxu0 0
    %2008 = vmatpush1.bf16.msra.mxu0 %v1550
    %2009 = vmatprep.subr.bf16.mxu0 0
    %2010 = vmatpush1.bf16.msra.mxu0 %v1551
    %2011 = vmatprep.subr.bf16.mxu0 0
    %2012 = vmatpush1.bf16.msra.mxu0 %v1552
    %2013 = vmatprep.subr.bf16.mxu0 0
    %2014 = vmatpush1.bf16.msra.mxu0 %v1553
    %2015 = vmatprep.subr.bf16.mxu0 0
    %2016 = vmatpush1.bf16.msra.mxu0 %v1554
    %2017 = vmatprep.subr.bf16.mxu0 0
    %2018 = vmatpush1.bf16.msra.mxu0 %v1555
    %2019 = vmatprep.subr.bf16.mxu0 0
    %2020 = vmatpush1.bf16.msra.mxu0 %v1556
    %2021 = vmatprep.subr.bf16.mxu0 0
    %2022 = vmatpush1.bf16.msra.mxu0 %v1557
    %2023 = vmatprep.subr.bf16.mxu0 0
    %2024 = vmatpush1.bf16.msra.mxu0 %v1558
    %2025 = vmatprep.subr.bf16.mxu0 0
    %2026 = vmatpush1.bf16.msra.mxu0 %v1559
    %2027 = vmatprep.subr.bf16.mxu0 0
    %2028 = vmatpush1.bf16.msra.mxu0 %v1560
    %2029 = vmatprep.subr.bf16.mxu0 0
    %2030 = vmatpush1.bf16.msra.mxu0 %v1561
    %2031 = vmatprep.subr.bf16.mxu0 0
    %2032 = vmatpush1.bf16.msra.mxu0 %v1562
    %2033 = vmatprep.subr.bf16.mxu0 0
    %2034 = vmatpush1.bf16.msra.mxu0 %v1563
    %2035 = vmatprep.subr.bf16.mxu0 0
    %2036 = vmatpush1.bf16.msra.mxu0 %v1564
    %2037 = vmatprep.mubr.bf16.mxu0 %v325
    %2038 = vmatmul.mubr.bf16.gmra.mrb[0].mxu0 %v324
    %v2039 = vpop.f32.mrb[0].mxu0
    %v2040 = vadd.f32 %v2000, %v2039
    %v2041 = vpop.f32.mrb[0].mxu0
    %v2042 = vpop.f32.mrb[0].mxu0
    %v2043 = vpop.f32.mrb[0].mxu0
    %2044 = vdwg.mxu0
    %2045 = vmatprep.subr.bf16.mxu0 0
    %2046 = vmatpush1.bf16.msra.mxu0 %v1565
    %2047 = vmatprep.subr.bf16.mxu0 0
    %2048 = vmatpush1.bf16.msra.mxu0 %v1566
    %2049 = vmatprep.subr.bf16.mxu0 0
    %2050 = vmatpush1.bf16.msra.mxu0 %v1567
    %2051 = vmatprep.subr.bf16.mxu0 0
    %2052 = vmatpush1.bf16.msra.mxu0 %v1568
    %2053 = vmatprep.subr.bf16.mxu0 0
    %2054 = vmatpush1.bf16.msra.mxu0 %v1569
    %2055 = vmatprep.subr.bf16.mxu0 0
    %2056 = vmatpush1.bf16.msra.mxu0 %v1570
    %2057 = vmatprep.subr.bf16.mxu0 0
    %2058 = vmatpush1.bf16.msra.mxu0 %v1571
    %2059 = vmatprep.subr.bf16.mxu0 0
    %2060 = vmatpush1.bf16.msra.mxu0 %v1572
    %2061 = vmatprep.subr.bf16.mxu0 0
    %2062 = vmatpush1.bf16.msra.mxu0 %v1573
    %2063 = vmatprep.subr.bf16.mxu0 0
    %2064 = vmatpush1.bf16.msra.mxu0 %v1574
    %2065 = vmatprep.subr.bf16.mxu0 0
    %2066 = vmatpush1.bf16.msra.mxu0 %v1575
    %2067 = vmatprep.subr.bf16.mxu0 0
    %2068 = vmatpush1.bf16.msra.mxu0 %v1576
    %2069 = vmatprep.subr.bf16.mxu0 0
    %2070 = vmatpush1.bf16.msra.mxu0 %v1577
    %2071 = vmatprep.subr.bf16.mxu0 0
    %2072 = vmatpush1.bf16.msra.mxu0 %v1578
    %2073 = vmatprep.subr.bf16.mxu0 0
    %2074 = vmatpush1.bf16.msra.mxu0 %v1579
    %2075 = vmatprep.subr.bf16.mxu0 0
    %2076 = vmatpush1.bf16.msra.mxu0 %v1580
    %2077 = vmatprep.mubr.bf16.mxu0 %v327
    %2078 = vmatmul.mubr.bf16.gmra.mrb[0].mxu0 %v326
    %v2079 = vpop.f32.mrb[0].mxu0
    %v2080 = vadd.f32 %v2040, %v2079
    %v2081 = vpop.f32.mrb[0].mxu0
    %v2082 = vpop.f32.mrb[0].mxu0
    %v2083 = vpop.f32.mrb[0].mxu0
    %2084 = vdwg.mxu0
    %2085 = vmatprep.subr.bf16.mxu0 0
    %2086 = vmatpush1.bf16.msra.mxu0 %v1581
    %2087 = vmatprep.subr.bf16.mxu0 0
    %2088 = vmatpush1.bf16.msra.mxu0 %v1582
    %2089 = vmatprep.subr.bf16.mxu0 0
    %2090 = vmatpush1.bf16.msra.mxu0 %v1583
    %2091 = vmatprep.subr.bf16.mxu0 0
    %2092 = vmatpush1.bf16.msra.mxu0 %v1584
    %2093 = vmatprep.subr.bf16.mxu0 0
    %2094 = vmatpush1.bf16.msra.mxu0 %v1585
    %2095 = vmatprep.subr.bf16.mxu0 0
    %2096 = vmatpush1.bf16.msra.mxu0 %v1586
    %2097 = vmatprep.subr.bf16.mxu0 0
    %2098 = vmatpush1.bf16.msra.mxu0 %v1587
    %2099 = vmatprep.subr.bf16.mxu0 0
    %2100 = vmatpush1.bf16.msra.mxu0 %v1588
    %2101 = vmatprep.subr.bf16.mxu0 0
    %2102 = vmatpush1.bf16.msra.mxu0 %v1589
    %2103 = vmatprep.subr.bf16.mxu0 0
    %2104 = vmatpush1.bf16.msra.mxu0 %v1590
    %2105 = vmatprep.subr.bf16.mxu0 0
    %2106 = vmatpush1.bf16.msra.mxu0 %v1591
    %2107 = vmatprep.subr.bf16.mxu0 0
    %2108 = vmatpush1.bf16.msra.mxu0 %v1592
    %2109 = vmatprep.subr.bf16.mxu0 0
    %2110 = vmatpush1.bf16.msra.mxu0 %v1593
    %2111 = vmatprep.subr.bf16.mxu0 0
    %2112 = vmatpush1.bf16.msra.mxu0 %v1594
    %2113 = vmatprep.subr.bf16.mxu0 0
    %2114 = vmatpush1.bf16.msra.mxu0 %v1595
    %2115 = vmatprep.subr.bf16.mxu0 0
    %2116 = vmatpush1.bf16.msra.mxu0 %v1596
    %2117 = vmatprep.mubr.bf16.mxu0 %v329
    %2118 = vmatmul.mubr.bf16.gmra.mrb[0].mxu0 %v328
    %v2119 = vpop.f32.mrb[0].mxu0
    %v2120 = vadd.f32 %v2080, %v2119
    %v2121 = vpop.f32.mrb[0].mxu0
    %v2122 = vpop.f32.mrb[0].mxu0
    %v2123 = vpop.f32.mrb[0].mxu0
    %2124 = vdwg.mxu0
    %2125 = vmatprep.subr.bf16.mxu0 0
    %2126 = vmatpush1.bf16.msra.mxu0 %v1597
    %2127 = vmatprep.subr.bf16.mxu0 0
    %2128 = vmatpush1.bf16.msra.mxu0 %v1598
    %2129 = vmatprep.subr.bf16.mxu0 0
    %2130 = vmatpush1.bf16.msra.mxu0 %v1599
    %2131 = vmatprep.subr.bf16.mxu0 0
    %2132 = vmatpush1.bf16.msra.mxu0 %v1600
    %2133 = vmatprep.subr.bf16.mxu0 0
    %2134 = vmatpush1.bf16.msra.mxu0 %v1601
    %2135 = vmatprep.subr.bf16.mxu0 0
    %2136 = vmatpush1.bf16.msra.mxu0 %v1602
    %2137 = vmatprep.subr.bf16.mxu0 0
    %2138 = vmatpush1.bf16.msra.mxu0 %v1603
    %2139 = vmatprep.subr.bf16.mxu0 0
    %2140 = vmatpush1.bf16.msra.mxu0 %v1604
    %2141 = vmatprep.subr.bf16.mxu0 0
    %2142 = vmatpush1.bf16.msra.mxu0 %v1605
    %2143 = vmatprep.subr.bf16.mxu0 0
    %2144 = vmatpush1.bf16.msra.mxu0 %v1606
    %2145 = vmatprep.subr.bf16.mxu0 0
    %2146 = vmatpush1.bf16.msra.mxu0 %v1607
    %2147 = vmatprep.subr.bf16.mxu0 0
    %2148 = vmatpush1.bf16.msra.mxu0 %v1608
    %2149 = vmatprep.subr.bf16.mxu0 0
    %2150 = vmatpush1.bf16.msra.mxu0 %v1609
    %2151 = vmatprep.subr.bf16.mxu0 0
    %2152 = vmatpush1.bf16.msra.mxu0 %v1610
    %2153 = vmatprep.subr.bf16.mxu0 0
    %2154 = vmatpush1.bf16.msra.mxu0 %v1611
    %2155 = vmatprep.subr.bf16.mxu0 0
    %2156 = vmatpush1.bf16.msra.mxu0 %v1612
    %2157 = vmatprep.mubr.bf16.mxu0 %v331
    %2158 = vmatmul.mubr.bf16.gmra.mrb[0].mxu0 %v330
    %v2159 = vpop.f32.mrb[0].mxu0
    %v2160 = vadd.f32 %v2120, %v2159
    %v2161 = vpop.f32.mrb[0].mxu0
    %v2162 = vpop.f32.mrb[0].mxu0
    %v2163 = vpop.f32.mrb[0].mxu0
    %2164 = vdwg.mxu0
    %2165 = vmatprep.subr.bf16.mxu0 0
    %2166 = vmatpush1.bf16.msra.mxu0 %v1613
    %2167 = vmatprep.subr.bf16.mxu0 0
    %2168 = vmatpush1.bf16.msra.mxu0 %v1614
    %2169 = vmatprep.subr.bf16.mxu0 0
    %2170 = vmatpush1.bf16.msra.mxu0 %v1615
    %2171 = vmatprep.subr.bf16.mxu0 0
    %2172 = vmatpush1.bf16.msra.mxu0 %v1616
    %2173 = vmatprep.subr.bf16.mxu0 0
    %2174 = vmatpush1.bf16.msra.mxu0 %v1617
    %2175 = vmatprep.subr.bf16.mxu0 0
    %2176 = vmatpush1.bf16.msra.mxu0 %v1618
    %2177 = vmatprep.subr.bf16.mxu0 0
    %2178 = vmatpush1.bf16.msra.mxu0 %v1619
    %2179 = vmatprep.subr.bf16.mxu0 0
    %2180 = vmatpush1.bf16.msra.mxu0 %v1620
    %2181 = vmatprep.subr.bf16.mxu0 0
    %2182 = vmatpush1.bf16.msra.mxu0 %v1621
    %2183 = vmatprep.subr.bf16.mxu0 0
    %2184 = vmatpush1.bf16.msra.mxu0 %v1622
    %2185 = vmatprep.subr.bf16.mxu0 0
    %2186 = vmatpush1.bf16.msra.mxu0 %v1623
    %2187 = vmatprep.subr.bf16.mxu0 0
    %2188 = vmatpush1.bf16.msra.mxu0 %v1624
    %2189 = vmatprep.subr.bf16.mxu0 0
    %2190 = vmatpush1.bf16.msra.mxu0 %v1625
    %2191 = vmatprep.subr.bf16.mxu0 0
    %2192 = vmatpush1.bf16.msra.mxu0 %v1626
    %2193 = vmatprep.subr.bf16.mxu0 0
    %2194 = vmatpush1.bf16.msra.mxu0 %v1627
    %2195 = vmatprep.subr.bf16.mxu0 0
    %2196 = vmatpush1.bf16.msra.mxu0 %v1628
    %2197 = vmatprep.mubr.bf16.mxu0 %v333
    %2198 = vmatmul.mubr.bf16.gmra.mrb[0].mxu0 %v332
    %v2199 = vpop.f32.mrb[0].mxu0
    %v2200 = vadd.f32 %v2160, %v2199
    %v2201 = vpop.f32.mrb[0].mxu0
    %v2202 = vpop.f32.mrb[0].mxu0
    %v2203 = vpop.f32.mrb[0].mxu0
    %2204 = vdwg.mxu0
    %2205 = vmatprep.subr.bf16.mxu0 0
    %2206 = vmatpush1.bf16.msra.mxu0 %v1629
    %2207 = vmatprep.subr.bf16.mxu0 0
    %2208 = vmatpush1.bf16.msra.mxu0 %v1630
    %2209 = vmatprep.subr.bf16.mxu0 0
    %2210 = vmatpush1.bf16.msra.mxu0 %v1631
    %2211 = vmatprep.subr.bf16.mxu0 0
    %2212 = vmatpush1.bf16.msra.mxu0 %v1632
    %2213 = vmatprep.subr.bf16.mxu0 0
    %2214 = vmatpush1.bf16.msra.mxu0 %v1633
    %2215 = vmatprep.subr.bf16.mxu0 0
    %2216 = vmatpush1.bf16.msra.mxu0 %v1634
    %2217 = vmatprep.subr.bf16.mxu0 0
    %2218 = vmatpush1.bf16.msra.mxu0 %v1635
    %2219 = vmatprep.subr.bf16.mxu0 0
    %2220 = vmatpush1.bf16.msra.mxu0 %v1636
    %2221 = vmatprep.subr.bf16.mxu0 0
    %2222 = vmatpush1.bf16.msra.mxu0 %v1637
    %2223 = vmatprep.subr.bf16.mxu0 0
    %2224 = vmatpush1.bf16.msra.mxu0 %v1638
    %2225 = vmatprep.subr.bf16.mxu0 0
    %2226 = vmatpush1.bf16.msra.mxu0 %v1639
    %2227 = vmatprep.subr.bf16.mxu0 0
    %2228 = vmatpush1.bf16.msra.mxu0 %v1640
    %2229 = vmatprep.subr.bf16.mxu0 0
    %2230 = vmatpush1.bf16.msra.mxu0 %v1641
    %2231 = vmatprep.subr.bf16.mxu0 0
    %2232 = vmatpush1.bf16.msra.mxu0 %v1642
    %2233 = vmatprep.subr.bf16.mxu0 0
    %2234 = vmatpush1.bf16.msra.mxu0 %v1643
    %2235 = vmatprep.subr.bf16.mxu0 0
    %2236 = vmatpush1.bf16.msra.mxu0 %v1644
    %2237 = vmatprep.mubr.bf16.mxu0 %v335
    %2238 = vmatmul.mubr.bf16.gmra.mrb[0].mxu0 %v334
    %v2239 = vpop.f32.mrb[0].mxu0
    %v2240 = vadd.f32 %v2200, %v2239
    %v2241 = vpop.f32.mrb[0].mxu0
    %v2242 = vpop.f32.mrb[0].mxu0
    %v2243 = vpop.f32.mrb[0].mxu0
    %2244 = vdwg.mxu0
    %2245 = vmatprep.subr.bf16.mxu0 0
    %2246 = vmatpush1.bf16.msra.mxu0 %v1645
    %2247 = vmatprep.subr.bf16.mxu0 0
    %2248 = vmatpush1.bf16.msra.mxu0 %v1646
    %2249 = vmatprep.subr.bf16.mxu0 0
    %2250 = vmatpush1.bf16.msra.mxu0 %v1647
    %2251 = vmatprep.subr.bf16.mxu0 0
    %2252 = vmatpush1.bf16.msra.mxu0 %v1648
    %2253 = vmatprep.subr.bf16.mxu0 0
    %2254 = vmatpush1.bf16.msra.mxu0 %v1649
    %2255 = vmatprep.subr.bf16.mxu0 0
    %2256 = vmatpush1.bf16.msra.mxu0 %v1650
    %2257 = vmatprep.subr.bf16.mxu0 0
    %2258 = vmatpush1.bf16.msra.mxu0 %v1651
    %2259 = vmatprep.subr.bf16.mxu0 0
    %2260 = vmatpush1.bf16.msra.mxu0 %v1652
    %2261 = vmatprep.subr.bf16.mxu0 0
    %2262 = vmatpush1.bf16.msra.mxu0 %v1653
    %2263 = vmatprep.subr.bf16.mxu0 0
    %2264 = vmatpush1.bf16.msra.mxu0 %v1654
    %2265 = vmatprep.subr.bf16.mxu0 0
    %2266 = vmatpush1.bf16.msra.mxu0 %v1655
    %2267 = vmatprep.subr.bf16.mxu0 0
    %2268 = vmatpush1.bf16.msra.mxu0 %v1656
    %2269 = vmatprep.subr.bf16.mxu0 0
    %2270 = vmatpush1.bf16.msra.mxu0 %v1657
    %2271 = vmatprep.subr.bf16.mxu0 0
    %2272 = vmatpush1.bf16.msra.mxu0 %v1658
    %2273 = vmatprep.subr.bf16.mxu0 0
    %2274 = vmatpush1.bf16.msra.mxu0 %v1659
    %2275 = vmatprep.subr.bf16.mxu0 0
    %2276 = vmatpush1.bf16.msra.mxu0 %v1660
    %2277 = vmatprep.mubr.bf16.mxu0 %v337
    %2278 = vmatmul.mubr.bf16.gmra.mrb[0].mxu0 %v336
    %v2279 = vpop.f32.mrb[0].mxu0
    %v2280 = vadd.f32 %v2240, %v2279
    %v2281 = vpop.f32.mrb[0].mxu0
    %v2282 = vpop.f32.mrb[0].mxu0
    %v2283 = vpop.f32.mrb[0].mxu0
    %2284 = vdwg.mxu0
    %2285 = vmatprep.subr.bf16.mxu0 0
    %2286 = vmatpush1.bf16.msra.mxu0 %v1661
    %2287 = vmatprep.subr.bf16.mxu0 0
    %2288 = vmatpush1.bf16.msra.mxu0 %v1662
    %2289 = vmatprep.subr.bf16.mxu0 0
    %2290 = vmatpush1.bf16.msra.mxu0 %v1663
    %2291 = vmatprep.subr.bf16.mxu0 0
    %2292 = vmatpush1.bf16.msra.mxu0 %v1664
    %2293 = vmatprep.subr.bf16.mxu0 0
    %2294 = vmatpush1.bf16.msra.mxu0 %v1665
    %2295 = vmatprep.subr.bf16.mxu0 0
    %2296 = vmatpush1.bf16.msra.mxu0 %v1666
    %2297 = vmatprep.subr.bf16.mxu0 0
    %2298 = vmatpush1.bf16.msra.mxu0 %v1667
    %2299 = vmatprep.subr.bf16.mxu0 0
    %2300 = vmatpush1.bf16.msra.mxu0 %v1668
    %2301 = vmatprep.subr.bf16.mxu0 0
    %2302 = vmatpush1.bf16.msra.mxu0 %v1669
    %2303 = vmatprep.subr.bf16.mxu0 0
    %2304 = vmatpush1.bf16.msra.mxu0 %v1670
    %2305 = vmatprep.subr.bf16.mxu0 0
    %2306 = vmatpush1.bf16.msra.mxu0 %v1671
    %2307 = vmatprep.subr.bf16.mxu0 0
    %2308 = vmatpush1.bf16.msra.mxu0 %v1672
    %2309 = vmatprep.subr.bf16.mxu0 0
    %2310 = vmatpush1.bf16.msra.mxu0 %v1673
    %2311 = vmatprep.subr.bf16.mxu0 0
    %2312 = vmatpush1.bf16.msra.mxu0 %v1674
    %2313 = vmatprep.subr.bf16.mxu0 0
    %2314 = vmatpush1.bf16.msra.mxu0 %v1675
    %2315 = vmatprep.subr.bf16.mxu0 0
    %2316 = vmatpush1.bf16.msra.mxu0 %v1676
    %2317 = vmatprep.mubr.bf16.mxu0 %v339
    %2318 = vmatmul.mubr.bf16.gmra.mrb[0].mxu0 %v338
    %v2319 = vpop.f32.mrb[0].mxu0
    %v2320 = vadd.f32 %v2280, %v2319
    %v2321 = vpop.f32.mrb[0].mxu0
    %v2322 = vpop.f32.mrb[0].mxu0
    %v2323 = vpop.f32.mrb[0].mxu0
    %2324 = vdwg.mxu0
    %2325 = vmatprep.subr.bf16.mxu0 0
    %2326 = vmatpush1.bf16.msra.mxu0 %v1677
    %2327 = vmatprep.subr.bf16.mxu0 0
    %2328 = vmatpush1.bf16.msra.mxu0 %v1678
    %2329 = vmatprep.subr.bf16.mxu0 0
    %2330 = vmatpush1.bf16.msra.mxu0 %v1679
    %2331 = vmatprep.subr.bf16.mxu0 0
    %2332 = vmatpush1.bf16.msra.mxu0 %v1680
    %2333 = vmatprep.subr.bf16.mxu0 0
    %2334 = vmatpush1.bf16.msra.mxu0 %v1681
    %2335 = vmatprep.subr.bf16.mxu0 0
    %2336 = vmatpush1.bf16.msra.mxu0 %v1682
    %2337 = vmatprep.subr.bf16.mxu0 0
    %2338 = vmatpush1.bf16.msra.mxu0 %v1683
    %2339 = vmatprep.subr.bf16.mxu0 0
    %2340 = vmatpush1.bf16.msra.mxu0 %v1684
    %2341 = vmatprep.subr.bf16.mxu0 0
    %2342 = vmatpush1.bf16.msra.mxu0 %v1685
    %2343 = vmatprep.subr.bf16.mxu0 0
    %2344 = vmatpush1.bf16.msra.mxu0 %v1686
    %2345 = vmatprep.subr.bf16.mxu0 0
    %2346 = vmatpush1.bf16.msra.mxu0 %v1687
    %2347 = vmatprep.subr.bf16.mxu0 0
    %2348 = vmatpush1.bf16.msra.mxu0 %v1688
    %2349 = vmatprep.subr.bf16.mxu0 0
    %2350 = vmatpush1.bf16.msra.mxu0 %v1689
    %2351 = vmatprep.subr.bf16.mxu0 0
    %2352 = vmatpush1.bf16.msra.mxu0 %v1690
    %2353 = vmatprep.subr.bf16.mxu0 0
    %2354 = vmatpush1.bf16.msra.mxu0 %v1691
    %2355 = vmatprep.subr.bf16.mxu0 0
    %2356 = vmatpush1.bf16.msra.mxu0 %v1692
    %2357 = vmatprep.mubr.bf16.mxu0 %v341
    %2358 = vmatmul.mubr.bf16.gmra.mrb[0].mxu0 %v340
    %v2359 = vpop.f32.mrb[0].mxu0
    %v2360 = vadd.f32 %v2320, %v2359
    %v2361 = vpop.f32.mrb[0].mxu0
    %v2362 = vpop.f32.mrb[0].mxu0
    %v2363 = vpop.f32.mrb[0].mxu0
    %2364 = vdwg.mxu0
    %v2365 = vmin.f32 %v2360, 0.0
    %v2366 = vand.u32 2147483647, %v2360
    %v2367 = vsub.f32 0.0, %v2366
    %v2368 = vmul.f32 %v2367, 1.442695
    %v2369 = vpow.pop %v2368
    %v2370 = vadd.f32 %v2369, 1.0
    %v2371 = vlog2.pop %v2370
    %v2372 = vmul.f32 %v2371, 0.6931472
    %v2373 = vmul.f32 -0.5, %v2369
    %v2374 = vadd.f32 %v2373, 1.0
    %v2375 = vmul.f32 %v2374, %v2369
    %v2376 = vand.u32 2147483647, %v2369
    %vm2377 = vcmp.lt.f32.partialorder %v2376, 0.0004427343
    %v2378 = vsel %vm2377, %v2375, %v2372
    %v2379 = vsub.f32 %v2365, %v2378
    %2380 = vst [vmem:[#allocation5] sm:$0xff] %v2379
    // Predicated region
    $region18: #{lazynet2_forward.1} parent=1 // pred_check
      _
    $region19: #{lazynet2_forward.1} parent=1 // pred_check_branch
      %2382 = sbr.rel (0) target = $region21
    $region20: #{lazynet2_forward.1} parent=1 // pred_region
      %s2384 = ssub.s32 128, 32
      %2385 = vsyncadd [#allocation4], %s2384
      %s2386 = sshll.u32 [#allocation5], 4
      %s2387 = int_to_ptr.vmem [resolvable:$true] %s2386
      %2392 = dma.vmem_to_hbm [thread:$0]  %s2387, 32, %s3, [#allocation4], 32, 32, 2
    $region21: #{lazynet2_forward.1} parent=1 // pred_fallthru
      _
    // Predicated region
    $region22: #{lazynet2_forward.1} parent=1 // pred_check
      _
    $region23: #{lazynet2_forward.1} parent=1 // pred_check_branch
      %2394 = sbr.rel (0) target = $region25
    $region24: #{lazynet2_forward.1} parent=1 // pred_region
      %2395 = dma.done [#allocation4], 128
    $region25: #{lazynet2_forward.1} parent=1 // pred_fallthru
      _
    %2396 = vsyncpa [#allocation3], 1
    %2397 = vsyncpa [#allocation4], 1

</llo_original>
